<compile_context>
chip_gen: v6e
topology: v6e:2x2x1
jax: 0.10.0
libtpu: 0.0.40
codegen_flags: <defaults>
</compile_context>

<pallas_src>
import math
import functools

import numpy as np
import jax
import jax.numpy as jnp
from jax.experimental import pallas as pl
from jax.experimental.pallas import tpu as pltpu

EPS = 1e-5  # PyTorch LayerNorm default


# ------------------------------- kernel ---------------------------------------

def adapter_kernel(x_ref,
                   g1_ref, be1_ref, w1_ref, b1_ref,
                   g2_ref, be2_ref, w2_ref, b2_ref,
                   g3_ref, be3_ref, w3_ref, b3_ref,
                   o_ref, *, slice_len, halo, nb, roll_positive_down):
    """One grid step processes an [MB, C] row block; rows are ordered (b, t, h).

    slice_len = T*H (rows per b-slice), halo = H (row distance of one t step).
    roll_positive_down: True/False -> use pltpu.roll for the +/-1 time shifts
      (value encodes the hardware rotate sign convention); None -> use the
      concat-with-zeros shift path.
    """
    x = x_ref[...].astype(jnp.float32)                      # [MB, C]
    mb = x.shape[0]
    use_roll = roll_positive_down is not None
    need_mask = use_roll or nb > 1
    if need_mask:
        # Rows with t == 0 have no t-1 neighbour; rows with t == T-1 have no
        # t+1 neighbour.  Block boundaries coincide with slice boundaries.
        r = jax.lax.broadcasted_iota(jnp.int32, (mb, 1), 0) % slice_len
        has_prev = r >= halo
        has_next = r < (slice_len - halo)

    def ln(h, g_ref, b_ref):
        # E[x] and E[x^2] are independent lane reductions (better ILP than
        # the (x-mu)^2 form); biased variance + eps matches nn.LayerNorm.
        mu = jnp.mean(h, axis=-1, keepdims=True)
        ex2 = jnp.mean(h * h, axis=-1, keepdims=True)
        inv = jax.lax.rsqrt(ex2 - mu * mu + EPS)
        return (h - mu) * inv * g_ref[...] + b_ref[...]

    def conv1x3(h, w_ref, b_ref):
        # Fused-tap conv: one MXU matmul [MB, 3*Cin] @ [3*Cin, Cout].
        hb = h.astype(w_ref.dtype)            # bf16 (or f32) MXU operands
        cin = hb.shape[-1]
        if use_roll:
            # XLU rotation instead of sublane-misaligned concatenates.
            down = (halo if roll_positive_down else mb - halo) % mb
            hm1 = pltpu.roll(hb, down, axis=0)            # row i <- row i-halo
            hp1 = pltpu.roll(hb, (mb - down) % mb, axis=0)  # row i <- row i+halo
            hm1 = jnp.where(has_prev, hm1, 0.0)           # kill wraparound /
            hp1 = jnp.where(has_next, hp1, 0.0)           # cross-slice leakage
        else:
            z = jnp.zeros((halo, cin), hb.dtype)
            hm1 = jnp.concatenate([z, hb[:-halo, :]], axis=0)
            hp1 = jnp.concatenate([hb[halo:, :], z], axis=0)
            if nb > 1:  # interior slice boundaries need masking
                hm1 = jnp.where(has_prev, hm1, 0.0)
                hp1 = jnp.where(has_next, hp1, 0.0)
        hcat = jnp.concatenate([hm1, hb, hp1], axis=-1)   # [MB, 3*Cin]
        y = jnp.dot(hcat, w_ref[...], preferred_element_type=jnp.float32)
        return y + b_ref[...]

    h = ln(x, g1_ref, be1_ref)
    h = jnp.maximum(conv1x3(h, w1_ref, b1_ref), 0.0)
    h = ln(h, g2_ref, be2_ref)
    h = jnp.maximum(conv1x3(h, w2_ref, b2_ref), 0.0)
    h = ln(h, g3_ref, be3_ref)
    o_ref[...] = conv1x3(h, w3_ref, b3_ref).astype(o_ref.dtype)


# ------------------------- hardware / sizing helpers ---------------------------

def _vmem_limit_bytes(default=48 * 1024 * 1024):
    """Scoped-VMEM limit: ~75% of physical capacity, capped at 112 MiB."""
    try:
        info = pltpu.get_tpu_info()
        cap = getattr(info, "vmem_capacity_bytes", None)
        if not cap:
            return default
        return min((int(cap) * 3) // 4, 112 * 1024 * 1024)
    except Exception:
        return default


@functools.lru_cache(maxsize=1)
def _roll_direction():
    """Probe pltpu.roll's sublane rotate sign convention once.

    Returns True if a positive shift moves rows toward higher indices
    (jnp.roll convention), False if the opposite, None if sublane roll is
    unavailable (caller falls back to concat shifts)."""
    try:
        def k(x_ref, o_ref):
            o_ref[...] = pltpu.roll(x_ref[...], 1, axis=0)
        x = jnp.tile(jnp.arange(8, dtype=jnp.float32)[:, None], (1, 128))
        y = pl.pallas_call(
            k, out_shape=jax.ShapeDtypeStruct((8, 128), jnp.float32))(x)
        v = float(jax.device_get(y)[1, 0])
        if v == 0.0:
            return True
        if v == 2.0:
            return False
        return None
    except Exception:
        return None


def _choose_nb(B, L, *, target_rows=512, min_steps=4):
    """Slices per grid step.  Block rows (NB*L) must be a multiple of 8 (or the
    full array).  Prefer blocks near target_rows with >= min_steps grid steps
    (megacore sharding + DMA/compute overlap), degrading gracefully."""
    candidates = [nb for nb in range(1, B + 1)
                  if B % nb == 0 and ((nb * L) % 8 == 0 or nb == B)]
    if not candidates:
        return B
    fitting = [nb for nb in candidates if nb * L <= target_rows]
    if not fitting:
        # Even one slice exceeds the row target: keep VMEM bounded at one
        # slice per step (see TODO(synk) on T-tiling for very long sequences).
        return 1
    for want in (min_steps, 2, 1):
        ok = [nb for nb in fitting if B // nb >= want]
        if ok:
            return max(ok)
    return min(fitting)


# ------------------------------- wrapper ---------------------------------------

def light_conv_adapter_forward(x, params, *, matmul_dtype=jnp.bfloat16,
                               target_rows=512, roll_dir="auto"):
    """x: [B, T, H, C] float32 -> [B, T, H, C]."""
    B, T, H, C = x.shape
    Hd = params["b1"].shape[-1]
    L = T * H
    # Free row-major reshape (merges adjacent dims): NO transpose, no HBM copy.
    x2 = x.reshape(B * L, C)

    NB = _choose_nb(B, L, target_rows=target_rows)
    MB = NB * L
    grid = (B // NB,)

    md = jnp.dtype(matmul_dtype)
    w1m = params["w1m"].astype(md)   # bf16 weights: half the DMA/VMEM
    w2m = params["w2m"].astype(md)
    w3m = params["w3m"].astype(md)
    args = (x2,
            params["g1"], params["be1"], w1m, params["b1"],
            params["g2"], params["be2"], w2m, params["b2"],
            params["g3"], params["be3"], w3m, params["b3"])

    if roll_dir == "auto":
        roll_dir = _roll_direction()
    vmem_limit = _vmem_limit_bytes()

    def build(fancy):
        def const_spec(shape):
            nd = len(shape)
            idx = lambda i: (0,) * nd
            if fancy and hasattr(pl, "Buffered"):
                try:
                    # Grid-invariant operands: single-buffer so weights are
                    # not held twice in VMEM.
                    return pl.BlockSpec(shape, idx, pipeline_mode=pl.Buffered(1))
                except TypeError:
                    pass
            return pl.BlockSpec(shape, idx)

        kernel = functools.partial(
            adapter_kernel, slice_len=L, halo=H, nb=NB,
            roll_positive_down=(roll_dir if fancy else None))

        return pl.pallas_call(
            kernel,
            out_shape=jax.ShapeDtypeStruct((B * L, C), x.dtype),
            grid=grid,
            in_specs=[
                pl.BlockSpec((MB, C), lambda i: (i, 0)),        # x row block
                const_spec((1, C)), const_spec((1, C)),         # LN1
                const_spec((3 * C, Hd)), const_spec((1, Hd)),   # conv1 Wcat/b
                const_spec((1, Hd)), const_spec((1, Hd)),       # LN2
                const_spec((3 * Hd, Hd)), const_spec((1, Hd)),  # conv2
                const_spec((1, Hd)), const_spec((1, Hd)),       # LN3
                const_spec((3 * Hd, C)), const_spec((1, C)),    # conv3
            ],
            out_specs=pl.BlockSpec((MB, C), lambda i: (i, 0)),
            compiler_params=pltpu.CompilerParams(
                dimension_semantics=("parallel",),
                vmem_limit_bytes=vmem_limit),
        )

    try:
        out = build(True)(*args)
    except Exception:
        # Conservative fallback: double-buffered constants + concat shifts.
        out = build(False)(*args)
    return out.reshape(B, T, H, C)


# ----------------------- parameter init (deterministic) -----------------------

def make_params(key, C, hidden_factor=1.0):
    Hd = int(C * hidden_factor)
    ks = jax.random.split(key, 12)

    def conv_init(kw, kb, out_c, in_c):
        fan_in = in_c * 1 * 3
        bound = 1.0 / math.sqrt(fan_in)
        w = jax.random.uniform(kw, (out_c, in_c, 1, 3), jnp.float32, -bound, bound)
        b = jax.random.uniform(kb, (out_c,), jnp.float32, -bound, bound)
        return w, b

    w1, b1 = conv_init(ks[0], ks[1], Hd, C)
    w2, b2 = conv_init(ks[2], ks[3], Hd, Hd)
    w3, b3 = conv_init(ks[4], ks[5], C, Hd)

    def ln_init(k, dim):
        kg, kb = jax.random.split(k)
        g = 1.0 + 0.1 * jax.random.normal(kg, (dim,), jnp.float32)
        b = 0.1 * jax.random.normal(kb, (dim,), jnp.float32)
        return g, b

    g1, be1 = ln_init(ks[6], C)
    g2, be2 = ln_init(ks[7], Hd)
    g3, be3 = ln_init(ks[8], Hd)

    def conv_w_to_cat(w):
        # (out, in, 1, 3) -> (3, in, out) -> (3*in, out); row = tap*in + cin
        out_c, in_c = w.shape[0], w.shape[1]
        return jnp.transpose(w[:, :, 0, :], (2, 1, 0)).reshape(3 * in_c, out_c)

    return dict(
        # raw (PyTorch-layout) weights for the reference
        w1=w1, b1raw=b1, w2=w2, b2raw=b2, w3=w3, b3raw=b3,
        g1raw=g1, be1raw=be1, g2raw=g2, be2raw=be2, g3raw=g3, be3raw=be3,
        # kernel-layout weights (fused-tap matrices, K = 3*Cin), stored f32;
        # the wrapper casts them to the requested matmul dtype.
        w1m=conv_w_to_cat(w1), b1=b1[None, :],
        w2m=conv_w_to_cat(w2), b2=b2[None, :],
        w3m=conv_w_to_cat(w3), b3=b3[None, :],
        g1=g1[None, :], be1=be1[None, :],
        g2=g2[None, :], be2=be2[None, :],
        g3=g3[None, :], be3=be3[None, :],
    )


# ---------------------------- pure-JAX reference ------------------------------

def reference_forward(x, params):
    def ln(h, g, b):
        mu = h.mean(-1, keepdims=True)
        var = ((h - mu) ** 2).mean(-1, keepdims=True)
        return (h - mu) / jnp.sqrt(var + EPS) * g + b

    def conv(h_bthc, w, b):
        # b t h c -> b c h t (NCHW), conv (1,3) pad (0,1), back
        h_nchw = jnp.transpose(h_bthc, (0, 3, 2, 1))
        y = jax.lax.conv_general_dilated(
            h_nchw, w, window_strides=(1, 1), padding=((0, 0), (1, 1)),
            dimension_numbers=("NCHW", "OIHW", "NCHW"))
        y = y + b[None, :, None, None]
        return jnp.transpose(y, (0, 3, 2, 1))

    h = ln(x, params["g1raw"], params["be1raw"])
    h = jax.nn.relu(conv(h, params["w1"], params["b1raw"]))
    h = ln(h, params["g2raw"], params["be2raw"])
    h = jax.nn.relu(conv(h, params["w2"], params["b2raw"]))
    h = ln(h, params["g3raw"], params["be3raw"])
    return conv(h, params["w3"], params["b3raw"])


if __name__ == "__main__":
    B, T, H, C = 2, 8, 4, 32   # source_size[-1] = C; hidden_size_factor = 1.0
    key = jax.random.PRNGKey(0)
    kx, kp = jax.random.split(key)
    x = jax.random.normal(kx, (B, T, H, C), jnp.float32)
    params = make_params(kp, C, hidden_factor=1.0)

    ref = jax.block_until_ready(reference_forward(x, params))

    # Precise path (f32 matmul operands): tight check of the kernel math.
    out_f32 = jax.block_until_ready(
        light_conv_adapter_forward(x, params, matmul_dtype=jnp.float32))
    assert out_f32.shape == x.shape
    np.testing.assert_allclose(np.asarray(out_f32), np.asarray(ref),
                               rtol=1e-4, atol=1e-4)

    # Fast path (bf16 MXU operands, f32 accumulate / LayerNorm): looser band.
    out_bf16 = jax.block_until_ready(light_conv_adapter_forward(x, params))
    assert out_bf16.shape == x.shape
    np.testing.assert_allclose(np.asarray(out_bf16), np.asarray(ref),
                               rtol=5e-2, atol=5e-2)

    print("KERNEL_OK")
</pallas_src>

<mosaic_0001>
module attributes {stable_mosaic.version = 11 : i64} {
  func.func @k(%arg0: memref<8x128xf32, #tpu.memory_space<vmem>>, %arg1: memref<8x128xf32, #tpu.memory_space<vmem>>) attributes {dimension_semantics = [], scalar_prefetch = 0 : i64, scratch_operands = 0 : i64, tpu.core_type = #tpu.core_type<tc>} {
    %c0 = arith.constant 0 : index
    %c0_0 = arith.constant 0 : index
    %0 = vector.load %arg0[%c0, %c0_0] : memref<8x128xf32, #tpu.memory_space<vmem>>, vector<8x128xf32>
    %c1_i32 = arith.constant 1 : i32
    %1 = tpu.dynamic_rotate %0 by %c1_i32 dim 0 : vector<8x128xf32>, i32 -> vector<8x128xf32>
    %c0_1 = arith.constant 0 : index
    %c0_2 = arith.constant 0 : index
    %2 = vector.load %arg1[%c0_1, %c0_2] : memref<8x128xf32, #tpu.memory_space<vmem>>, vector<8x128xf32>
    tpu.vector_store %arg1[%c0_1, %c0_2], %1 {strides = array<i32>} : memref<8x128xf32, #tpu.memory_space<vmem>>, vector<8x128xf32>,
    return
  }
}

module attributes {stable_mosaic.version = 11 : i64} {
  func.func @adapter_kernel(%arg0: i32, %arg1: memref<32x32xf32, #tpu.memory_space<vmem>>, %arg2: memref<1x32xf32, #tpu.memory_space<vmem>>, %arg3: memref<1x32xf32, #tpu.memory_space<vmem>>, %arg4: memref<96x32xf32, #tpu.memory_space<vmem>>, %arg5: memref<1x32xf32, #tpu.memory_space<vmem>>, %arg6: memref<1x32xf32, #tpu.memory_space<vmem>>, %arg7: memref<1x32xf32, #tpu.memory_space<vmem>>, %arg8: memref<96x32xf32, #tpu.memory_space<vmem>>, %arg9: memref<1x32xf32, #tpu.memory_space<vmem>>, %arg10: memref<1x32xf32, #tpu.memory_space<vmem>>, %arg11: memref<1x32xf32, #tpu.memory_space<vmem>>, %arg12: memref<96x32xf32, #tpu.memory_space<vmem>>, %arg13: memref<1x32xf32, #tpu.memory_space<vmem>>, %arg14: memref<32x32xf32, #tpu.memory_space<vmem>>) attributes {dimension_semantics = [#tpu.dimension_semantics<parallel>], iteration_bounds = array<i64: 2>, scalar_prefetch = 0 : i64, scratch_operands = 0 : i64, tpu.core_type = #tpu.core_type<tc>, window_params = [{transform_indices = @transform_0, window_bounds = array<i64: 32, 32>}, {pipeline_mode = #tpu.pipeline_mode<synchronous>, transform_indices = @transform_1, window_bounds = array<i64: 1, 32>}, {pipeline_mode = #tpu.pipeline_mode<synchronous>, transform_indices = @transform_2, window_bounds = array<i64: 1, 32>}, {pipeline_mode = #tpu.pipeline_mode<synchronous>, transform_indices = @transform_3, window_bounds = array<i64: 96, 32>}, {pipeline_mode = #tpu.pipeline_mode<synchronous>, transform_indices = @transform_4, window_bounds = array<i64: 1, 32>}, {pipeline_mode = #tpu.pipeline_mode<synchronous>, transform_indices = @transform_5, window_bounds = array<i64: 1, 32>}, {pipeline_mode = #tpu.pipeline_mode<synchronous>, transform_indices = @transform_6, window_bounds = array<i64: 1, 32>}, {pipeline_mode = #tpu.pipeline_mode<synchronous>, transform_indices = @transform_7, window_bounds = array<i64: 96, 32>}, {pipeline_mode = #tpu.pipeline_mode<synchronous>, transform_indices = @transform_8, window_bounds = array<i64: 1, 32>}, {pipeline_mode = #tpu.pipeline_mode<synchronous>, transform_indices = @transform_9, window_bounds = array<i64: 1, 32>}, {pipeline_mode = #tpu.pipeline_mode<synchronous>, transform_indices = @transform_10, window_bounds = array<i64: 1, 32>}, {pipeline_mode = #tpu.pipeline_mode<synchronous>, transform_indices = @transform_11, window_bounds = array<i64: 96, 32>}, {pipeline_mode = #tpu.pipeline_mode<synchronous>, transform_indices = @transform_12, window_bounds = array<i64: 1, 32>}, {transform_indices = @transform_13, window_bounds = array<i64: 32, 32>}]} {
    %c0 = arith.constant 0 : index
    %c0_0 = arith.constant 0 : index
    %0 = vector.load %arg1[%c0, %c0_0] : memref<32x32xf32, #tpu.memory_space<vmem>>, vector<32x32xf32>
    %cst = arith.constant dense<0.000000e+00> : vector<32xf32>
    %1 = vector.multi_reduction <add>, %0, %cst [1] : vector<32x32xf32> to vector<32xf32>
    %2 = vector.shape_cast %1 : vector<32xf32> to vector<32x1xf32>
    %cst_1 = arith.constant 3.200000e+01 : f32
    %3 = vector.broadcast %cst_1 : f32 to vector<32x1xf32>
    %4 = arith.divf %2, %3 : vector<32x1xf32>
    %5 = arith.mulf %0, %0 : vector<32x32xf32>
    %cst_2 = arith.constant dense<0.000000e+00> : vector<32xf32>
    %6 = vector.multi_reduction <add>, %5, %cst_2 [1] : vector<32x32xf32> to vector<32xf32>
    %7 = vector.shape_cast %6 : vector<32xf32> to vector<32x1xf32>
    %cst_3 = arith.constant 3.200000e+01 : f32
    %8 = vector.broadcast %cst_3 : f32 to vector<32x1xf32>
    %9 = arith.divf %7, %8 : vector<32x1xf32>
    %10 = arith.mulf %4, %4 : vector<32x1xf32>
    %11 = arith.subf %9, %10 : vector<32x1xf32>
    %cst_4 = arith.constant 9.99999974E-6 : f32
    %12 = vector.broadcast %cst_4 : f32 to vector<32x1xf32>
    %13 = arith.addf %11, %12 : vector<32x1xf32>
    %14 = math.rsqrt %13 : vector<32x1xf32>
    %15 = vector.broadcast %4 : vector<32x1xf32> to vector<32x32xf32>
    %16 = arith.subf %0, %15 : vector<32x32xf32>
    %17 = vector.broadcast %14 : vector<32x1xf32> to vector<32x32xf32>
    %18 = arith.mulf %16, %17 : vector<32x32xf32>
    %c0_5 = arith.constant 0 : index
    %c0_6 = arith.constant 0 : index
    %19 = vector.load %arg2[%c0_5, %c0_6] : memref<1x32xf32, #tpu.memory_space<vmem>>, vector<1x32xf32>
    %20 = vector.broadcast %19 : vector<1x32xf32> to vector<32x32xf32>
    %21 = arith.mulf %18, %20 : vector<32x32xf32>
    %c0_7 = arith.constant 0 : index
    %c0_8 = arith.constant 0 : index
    %22 = vector.load %arg3[%c0_7, %c0_8] : memref<1x32xf32, #tpu.memory_space<vmem>>, vector<1x32xf32>
    %23 = vector.broadcast %22 : vector<1x32xf32> to vector<32x32xf32>
    %24 = arith.addf %21, %23 : vector<32x32xf32>
    %cst_9 = arith.constant 0.000000e+00 : f32
    %25 = vector.broadcast %cst_9 : f32 to vector<4x32xf32>
    %26 = vector.extract_strided_slice %24 {offsets = [0, 0], sizes = [28, 32], strides = [1, 1]} : vector<32x32xf32> to vector<28x32xf32>
    %27 = tpu.concatenate %25, %26 in 0 : vector<4x32xf32>, vector<28x32xf32> -> vector<32x32xf32>
    %28 = vector.extract_strided_slice %24 {offsets = [4, 0], sizes = [28, 32], strides = [1, 1]} : vector<32x32xf32> to vector<28x32xf32>
    %29 = tpu.concatenate %28, %25 in 0 : vector<28x32xf32>, vector<4x32xf32> -> vector<32x32xf32>
    %30 = tpu.concatenate %27, %24, %29 in 1 : vector<32x32xf32>, vector<32x32xf32>, vector<32x32xf32> -> vector<32x96xf32>
    %c0_10 = arith.constant 0 : index
    %c0_11 = arith.constant 0 : index
    %31 = vector.load %arg4[%c0_10, %c0_11] : memref<96x32xf32, #tpu.memory_space<vmem>>, vector<96x32xf32>
    %cst_12 = arith.constant dense<0.000000e+00> : vector<32x32xf32>
    %32 = tpu.matmul %30, %31, %cst_12 {dimension_numbers = #tpu.dot_dimension_numbers<[1], [0], [0], [1], [0, 0, 1, 1], [], []>} : vector<32x96xf32>, vector<96x32xf32>, vector<32x32xf32> -> vector<32x32xf32>
    %c0_13 = arith.constant 0 : index
    %c0_14 = arith.constant 0 : index
    %33 = vector.load %arg5[%c0_13, %c0_14] : memref<1x32xf32, #tpu.memory_space<vmem>>, vector<1x32xf32>
    %34 = vector.broadcast %33 : vector<1x32xf32> to vector<32x32xf32>
    %35 = arith.addf %32, %34 : vector<32x32xf32>
    %cst_15 = arith.constant 0.000000e+00 : f32
    %36 = vector.broadcast %cst_15 : f32 to vector<32x32xf32>
    %37 = arith.maximumf %35, %36 : vector<32x32xf32>
    %cst_16 = arith.constant dense<0.000000e+00> : vector<32xf32>
    %38 = vector.multi_reduction <add>, %37, %cst_16 [1] : vector<32x32xf32> to vector<32xf32>
    %39 = vector.shape_cast %38 : vector<32xf32> to vector<32x1xf32>
    %cst_17 = arith.constant 3.200000e+01 : f32
    %40 = vector.broadcast %cst_17 : f32 to vector<32x1xf32>
    %41 = arith.divf %39, %40 : vector<32x1xf32>
    %42 = arith.mulf %37, %37 : vector<32x32xf32>
    %cst_18 = arith.constant dense<0.000000e+00> : vector<32xf32>
    %43 = vector.multi_reduction <add>, %42, %cst_18 [1] : vector<32x32xf32> to vector<32xf32>
    %44 = vector.shape_cast %43 : vector<32xf32> to vector<32x1xf32>
    %cst_19 = arith.constant 3.200000e+01 : f32
    %45 = vector.broadcast %cst_19 : f32 to vector<32x1xf32>
    %46 = arith.divf %44, %45 : vector<32x1xf32>
    %47 = arith.mulf %41, %41 : vector<32x1xf32>
    %48 = arith.subf %46, %47 : vector<32x1xf32>
    %cst_20 = arith.constant 9.99999974E-6 : f32
    %49 = vector.broadcast %cst_20 : f32 to vector<32x1xf32>
    %50 = arith.addf %48, %49 : vector<32x1xf32>
    %51 = math.rsqrt %50 : vector<32x1xf32>
    %52 = vector.broadcast %41 : vector<32x1xf32> to vector<32x32xf32>
    %53 = arith.subf %37, %52 : vector<32x32xf32>
    %54 = vector.broadcast %51 : vector<32x1xf32> to vector<32x32xf32>
    %55 = arith.mulf %53, %54 : vector<32x32xf32>
    %c0_21 = arith.constant 0 : index
    %c0_22 = arith.constant 0 : index
    %56 = vector.load %arg6[%c0_21, %c0_22] : memref<1x32xf32, #tpu.memory_space<vmem>>, vector<1x32xf32>
    %57 = vector.broadcast %56 : vector<1x32xf32> to vector<32x32xf32>
    %58 = arith.mulf %55, %57 : vector<32x32xf32>
    %c0_23 = arith.constant 0 : index
    %c0_24 = arith.constant 0 : index
    %59 = vector.load %arg7[%c0_23, %c0_24] : memref<1x32xf32, #tpu.memory_space<vmem>>, vector<1x32xf32>
    %60 = vector.broadcast %59 : vector<1x32xf32> to vector<32x32xf32>
    %61 = arith.addf %58, %60 : vector<32x32xf32>
    %cst_25 = arith.constant 0.000000e+00 : f32
    %62 = vector.broadcast %cst_25 : f32 to vector<4x32xf32>
    %63 = vector.extract_strided_slice %61 {offsets = [0, 0], sizes = [28, 32], strides = [1, 1]} : vector<32x32xf32> to vector<28x32xf32>
    %64 = tpu.concatenate %62, %63 in 0 : vector<4x32xf32>, vector<28x32xf32> -> vector<32x32xf32>
    %65 = vector.extract_strided_slice %61 {offsets = [4, 0], sizes = [28, 32], strides = [1, 1]} : vector<32x32xf32> to vector<28x32xf32>
    %66 = tpu.concatenate %65, %62 in 0 : vector<28x32xf32>, vector<4x32xf32> -> vector<32x32xf32>
    %67 = tpu.concatenate %64, %61, %66 in 1 : vector<32x32xf32>, vector<32x32xf32>, vector<32x32xf32> -> vector<32x96xf32>
    %c0_26 = arith.constant 0 : index
    %c0_27 = arith.constant 0 : index
    %68 = vector.load %arg8[%c0_26, %c0_27] : memref<96x32xf32, #tpu.memory_space<vmem>>, vector<96x32xf32>
    %cst_28 = arith.constant dense<0.000000e+00> : vector<32x32xf32>
    %69 = tpu.matmul %67, %68, %cst_28 {dimension_numbers = #tpu.dot_dimension_numbers<[1], [0], [0], [1], [0, 0, 1, 1], [], []>} : vector<32x96xf32>, vector<96x32xf32>, vector<32x32xf32> -> vector<32x32xf32>
    %c0_29 = arith.constant 0 : index
    %c0_30 = arith.constant 0 : index
    %70 = vector.load %arg9[%c0_29, %c0_30] : memref<1x32xf32, #tpu.memory_space<vmem>>, vector<1x32xf32>
    %71 = vector.broadcast %70 : vector<1x32xf32> to vector<32x32xf32>
    %72 = arith.addf %69, %71 : vector<32x32xf32>
    %cst_31 = arith.constant 0.000000e+00 : f32
    %73 = vector.broadcast %cst_31 : f32 to vector<32x32xf32>
    %74 = arith.maximumf %72, %73 : vector<32x32xf32>
    %cst_32 = arith.constant dense<0.000000e+00> : vector<32xf32>
    %75 = vector.multi_reduction <add>, %74, %cst_32 [1] : vector<32x32xf32> to vector<32xf32>
    %76 = vector.shape_cast %75 : vector<32xf32> to vector<32x1xf32>
    %cst_33 = arith.constant 3.200000e+01 : f32
    %77 = vector.broadcast %cst_33 : f32 to vector<32x1xf32>
    %78 = arith.divf %76, %77 : vector<32x1xf32>
    %79 = arith.mulf %74, %74 : vector<32x32xf32>
    %cst_34 = arith.constant dense<0.000000e+00> : vector<32xf32>
    %80 = vector.multi_reduction <add>, %79, %cst_34 [1] : vector<32x32xf32> to vector<32xf32>
    %81 = vector.shape_cast %80 : vector<32xf32> to vector<32x1xf32>
    %cst_35 = arith.constant 3.200000e+01 : f32
    %82 = vector.broadcast %cst_35 : f32 to vector<32x1xf32>
    %83 = arith.divf %81, %82 : vector<32x1xf32>
    %84 = arith.mulf %78, %78 : vector<32x1xf32>
    %85 = arith.subf %83, %84 : vector<32x1xf32>
    %cst_36 = arith.constant 9.99999974E-6 : f32
    %86 = vector.broadcast %cst_36 : f32 to vector<32x1xf32>
    %87 = arith.addf %85, %86 : vector<32x1xf32>
    %88 = math.rsqrt %87 : vector<32x1xf32>
    %89 = vector.broadcast %78 : vector<32x1xf32> to vector<32x32xf32>
    %90 = arith.subf %74, %89 : vector<32x32xf32>
    %91 = vector.broadcast %88 : vector<32x1xf32> to vector<32x32xf32>
    %92 = arith.mulf %90, %91 : vector<32x32xf32>
    %c0_37 = arith.constant 0 : index
    %c0_38 = arith.constant 0 : index
    %93 = vector.load %arg10[%c0_37, %c0_38] : memref<1x32xf32, #tpu.memory_space<vmem>>, vector<1x32xf32>
    %94 = vector.broadcast %93 : vector<1x32xf32> to vector<32x32xf32>
    %95 = arith.mulf %92, %94 : vector<32x32xf32>
    %c0_39 = arith.constant 0 : index
    %c0_40 = arith.constant 0 : index
    %96 = vector.load %arg11[%c0_39, %c0_40] : memref<1x32xf32, #tpu.memory_space<vmem>>, vector<1x32xf32>
    %97 = vector.broadcast %96 : vector<1x32xf32> to vector<32x32xf32>
    %98 = arith.addf %95, %97 : vector<32x32xf32>
    %cst_41 = arith.constant 0.000000e+00 : f32
    %99 = vector.broadcast %cst_41 : f32 to vector<4x32xf32>
    %100 = vector.extract_strided_slice %98 {offsets = [0, 0], sizes = [28, 32], strides = [1, 1]} : vector<32x32xf32> to vector<28x32xf32>
    %101 = tpu.concatenate %99, %100 in 0 : vector<4x32xf32>, vector<28x32xf32> -> vector<32x32xf32>
    %102 = vector.extract_strided_slice %98 {offsets = [4, 0], sizes = [28, 32], strides = [1, 1]} : vector<32x32xf32> to vector<28x32xf32>
    %103 = tpu.concatenate %102, %99 in 0 : vector<28x32xf32>, vector<4x32xf32> -> vector<32x32xf32>
    %104 = tpu.concatenate %101, %98, %103 in 1 : vector<32x32xf32>, vector<32x32xf32>, vector<32x32xf32> -> vector<32x96xf32>
    %c0_42 = arith.constant 0 : index
    %c0_43 = arith.constant 0 : index
    %105 = vector.load %arg12[%c0_42, %c0_43] : memref<96x32xf32, #tpu.memory_space<vmem>>, vector<96x32xf32>
    %cst_44 = arith.constant dense<0.000000e+00> : vector<32x32xf32>
    %106 = tpu.matmul %104, %105, %cst_44 {dimension_numbers = #tpu.dot_dimension_numbers<[1], [0], [0], [1], [0, 0, 1, 1], [], []>} : vector<32x96xf32>, vector<96x32xf32>, vector<32x32xf32> -> vector<32x32xf32>
    %c0_45 = arith.constant 0 : index
    %c0_46 = arith.constant 0 : index
    %107 = vector.load %arg13[%c0_45, %c0_46] : memref<1x32xf32, #tpu.memory_space<vmem>>, vector<1x32xf32>
    %108 = vector.broadcast %107 : vector<1x32xf32> to vector<32x32xf32>
    %109 = arith.addf %106, %108 : vector<32x32xf32>
    %c0_47 = arith.constant 0 : index
    %c0_48 = arith.constant 0 : index
    %110 = vector.load %arg14[%c0_47, %c0_48] : memref<32x32xf32, #tpu.memory_space<vmem>>, vector<32x32xf32>
    tpu.vector_store %arg14[%c0_47, %c0_48], %109 {strides = array<i32>} : memref<32x32xf32, #tpu.memory_space<vmem>>, vector<32x32xf32>,
    return
  }
  func.func @transform_0(%arg0: i32) -> (i32, i32) {
    %c0_i32 = arith.constant 0 : i32
    %c0_i32_0 = arith.constant 0 : i32
    return %arg0, %c0_i32 : i32, i32
  }
  func.func @transform_1(%arg0: i32) -> (i32, i32) {
    %c0_i32 = arith.constant 0 : i32
    %c0_i32_0 = arith.constant 0 : i32
    %c0_i32_1 = arith.constant 0 : i32
    return %c0_i32, %c0_i32_0 : i32, i32
  }
  func.func @transform_2(%arg0: i32) -> (i32, i32) {
    %c0_i32 = arith.constant 0 : i32
    %c0_i32_0 = arith.constant 0 : i32
    %c0_i32_1 = arith.constant 0 : i32
    return %c0_i32, %c0_i32_0 : i32, i32
  }
  func.func @transform_3(%arg0: i32) -> (i32, i32) {
    %c0_i32 = arith.constant 0 : i32
    %c0_i32_0 = arith.constant 0 : i32
    %c0_i32_1 = arith.constant 0 : i32
    return %c0_i32, %c0_i32_0 : i32, i32
  }
  func.func @transform_4(%arg0: i32) -> (i32, i32) {
    %c0_i32 = arith.constant 0 : i32
    %c0_i32_0 = arith.constant 0 : i32
    %c0_i32_1 = arith.constant 0 : i32
    return %c0_i32, %c0_i32_0 : i32, i32
  }
  func.func @transform_5(%arg0: i32) -> (i32, i32) {
    %c0_i32 = arith.constant 0 : i32
    %c0_i32_0 = arith.constant 0 : i32
    %c0_i32_1 = arith.constant 0 : i32
    return %c0_i32, %c0_i32_0 : i32, i32
  }
  func.func @transform_6(%arg0: i32) -> (i32, i32) {
    %c0_i32 = arith.constant 0 : i32
    %c0_i32_0 = arith.constant 0 : i32
    %c0_i32_1 = arith.constant 0 : i32
    return %c0_i32, %c0_i32_0 : i32, i32
  }
  func.func @transform_7(%arg0: i32) -> (i32, i32) {
    %c0_i32 = arith.constant 0 : i32
    %c0_i32_0 = arith.constant 0 : i32
    %c0_i32_1 = arith.constant 0 : i32
    return %c0_i32, %c0_i32_0 : i32, i32
  }
  func.func @transform_8(%arg0: i32) -> (i32, i32) {
    %c0_i32 = arith.constant 0 : i32
    %c0_i32_0 = arith.constant 0 : i32
    %c0_i32_1 = arith.constant 0 : i32
    return %c0_i32, %c0_i32_0 : i32, i32
  }
  func.func @transform_9(%arg0: i32) -> (i32, i32) {
    %c0_i32 = arith.constant 0 : i32
    %c0_i32_0 = arith.constant 0 : i32
    %c0_i32_1 = arith.constant 0 : i32
    return %c0_i32, %c0_i32_0 : i32, i32
  }
  func.func @transform_10(%arg0: i32) -> (i32, i32) {
    %c0_i32 = arith.constant 0 : i32
    %c0_i32_0 = arith.constant 0 : i32
    %c0_i32_1 = arith.constant 0 : i32
    return %c0_i32, %c0_i32_0 : i32, i32
  }
  func.func @transform_11(%arg0: i32) -> (i32, i32) {
    %c0_i32 = arith.constant 0 : i32
    %c0_i32_0 = arith.constant 0 : i32
    %c0_i32_1 = arith.constant 0 : i32
    return %c0_i32, %c0_i32_0 : i32, i32
  }
  func.func @transform_12(%arg0: i32) -> (i32, i32) {
    %c0_i32 = arith.constant 0 : i32
    %c0_i32_0 = arith.constant 0 : i32
    %c0_i32_1 = arith.constant 0 : i32
    return %c0_i32, %c0_i32_0 : i32, i32
  }
  func.func @transform_13(%arg0: i32) -> (i32, i32) {
    %c0_i32 = arith.constant 0 : i32
    %c0_i32_0 = arith.constant 0 : i32
    return %arg0, %c0_i32 : i32, i32
  }
}

module attributes {stable_mosaic.version = 11 : i64} {
  func.func @adapter_kernel(%arg0: i32, %arg1: memref<32x32xf32, #tpu.memory_space<vmem>>, %arg2: memref<1x32xf32, #tpu.memory_space<vmem>>, %arg3: memref<1x32xf32, #tpu.memory_space<vmem>>, %arg4: memref<96x32xf32, #tpu.memory_space<vmem>>, %arg5: memref<1x32xf32, #tpu.memory_space<vmem>>, %arg6: memref<1x32xf32, #tpu.memory_space<vmem>>, %arg7: memref<1x32xf32, #tpu.memory_space<vmem>>, %arg8: memref<96x32xf32, #tpu.memory_space<vmem>>, %arg9: memref<1x32xf32, #tpu.memory_space<vmem>>, %arg10: memref<1x32xf32, #tpu.memory_space<vmem>>, %arg11: memref<1x32xf32, #tpu.memory_space<vmem>>, %arg12: memref<96x32xf32, #tpu.memory_space<vmem>>, %arg13: memref<1x32xf32, #tpu.memory_space<vmem>>, %arg14: memref<32x32xf32, #tpu.memory_space<vmem>>) attributes {dimension_semantics = [#tpu.dimension_semantics<parallel>], iteration_bounds = array<i64: 2>, scalar_prefetch = 0 : i64, scratch_operands = 0 : i64, tpu.core_type = #tpu.core_type<tc>, window_params = [{transform_indices = @transform_0, window_bounds = array<i64: 32, 32>}, {pipeline_mode = #tpu.pipeline_mode<synchronous>, transform_indices = @transform_1, window_bounds = array<i64: 1, 32>}, {pipeline_mode = #tpu.pipeline_mode<synchronous>, transform_indices = @transform_2, window_bounds = array<i64: 1, 32>}, {pipeline_mode = #tpu.pipeline_mode<synchronous>, transform_indices = @transform_3, window_bounds = array<i64: 96, 32>}, {pipeline_mode = #tpu.pipeline_mode<synchronous>, transform_indices = @transform_4, window_bounds = array<i64: 1, 32>}, {pipeline_mode = #tpu.pipeline_mode<synchronous>, transform_indices = @transform_5, window_bounds = array<i64: 1, 32>}, {pipeline_mode = #tpu.pipeline_mode<synchronous>, transform_indices = @transform_6, window_bounds = array<i64: 1, 32>}, {pipeline_mode = #tpu.pipeline_mode<synchronous>, transform_indices = @transform_7, window_bounds = array<i64: 96, 32>}, {pipeline_mode = #tpu.pipeline_mode<synchronous>, transform_indices = @transform_8, window_bounds = array<i64: 1, 32>}, {pipeline_mode = #tpu.pipeline_mode<synchronous>, transform_indices = @transform_9, window_bounds = array<i64: 1, 32>}, {pipeline_mode = #tpu.pipeline_mode<synchronous>, transform_indices = @transform_10, window_bounds = array<i64: 1, 32>}, {pipeline_mode = #tpu.pipeline_mode<synchronous>, transform_indices = @transform_11, window_bounds = array<i64: 96, 32>}, {pipeline_mode = #tpu.pipeline_mode<synchronous>, transform_indices = @transform_12, window_bounds = array<i64: 1, 32>}, {transform_indices = @transform_13, window_bounds = array<i64: 32, 32>}]} {
    %c0 = arith.constant 0 : index
    %c0_0 = arith.constant 0 : index
    %0 = vector.load %arg1[%c0, %c0_0] : memref<32x32xf32, #tpu.memory_space<vmem>>, vector<32x32xf32>
    %cst = arith.constant dense<0.000000e+00> : vector<32xf32>
    %1 = vector.multi_reduction <add>, %0, %cst [1] : vector<32x32xf32> to vector<32xf32>
    %2 = vector.shape_cast %1 : vector<32xf32> to vector<32x1xf32>
    %cst_1 = arith.constant 3.200000e+01 : f32
    %3 = vector.broadcast %cst_1 : f32 to vector<32x1xf32>
    %4 = arith.divf %2, %3 : vector<32x1xf32>
    %5 = arith.mulf %0, %0 : vector<32x32xf32>
    %cst_2 = arith.constant dense<0.000000e+00> : vector<32xf32>
    %6 = vector.multi_reduction <add>, %5, %cst_2 [1] : vector<32x32xf32> to vector<32xf32>
    %7 = vector.shape_cast %6 : vector<32xf32> to vector<32x1xf32>
    %cst_3 = arith.constant 3.200000e+01 : f32
    %8 = vector.broadcast %cst_3 : f32 to vector<32x1xf32>
    %9 = arith.divf %7, %8 : vector<32x1xf32>
    %10 = arith.mulf %4, %4 : vector<32x1xf32>
    %11 = arith.subf %9, %10 : vector<32x1xf32>
    %cst_4 = arith.constant 9.99999974E-6 : f32
    %12 = vector.broadcast %cst_4 : f32 to vector<32x1xf32>
    %13 = arith.addf %11, %12 : vector<32x1xf32>
    %14 = math.rsqrt %13 : vector<32x1xf32>
    %15 = vector.broadcast %4 : vector<32x1xf32> to vector<32x32xf32>
    %16 = arith.subf %0, %15 : vector<32x32xf32>
    %17 = vector.broadcast %14 : vector<32x1xf32> to vector<32x32xf32>
    %18 = arith.mulf %16, %17 : vector<32x32xf32>
    %c0_5 = arith.constant 0 : index
    %c0_6 = arith.constant 0 : index
    %19 = vector.load %arg2[%c0_5, %c0_6] : memref<1x32xf32, #tpu.memory_space<vmem>>, vector<1x32xf32>
    %20 = vector.broadcast %19 : vector<1x32xf32> to vector<32x32xf32>
    %21 = arith.mulf %18, %20 : vector<32x32xf32>
    %c0_7 = arith.constant 0 : index
    %c0_8 = arith.constant 0 : index
    %22 = vector.load %arg3[%c0_7, %c0_8] : memref<1x32xf32, #tpu.memory_space<vmem>>, vector<1x32xf32>
    %23 = vector.broadcast %22 : vector<1x32xf32> to vector<32x32xf32>
    %24 = arith.addf %21, %23 : vector<32x32xf32>
    %cst_9 = arith.constant 0.000000e+00 : f32
    %25 = vector.broadcast %cst_9 : f32 to vector<4x32xf32>
    %26 = vector.extract_strided_slice %24 {offsets = [0, 0], sizes = [28, 32], strides = [1, 1]} : vector<32x32xf32> to vector<28x32xf32>
    %27 = tpu.concatenate %25, %26 in 0 : vector<4x32xf32>, vector<28x32xf32> -> vector<32x32xf32>
    %28 = vector.extract_strided_slice %24 {offsets = [4, 0], sizes = [28, 32], strides = [1, 1]} : vector<32x32xf32> to vector<28x32xf32>
    %29 = tpu.concatenate %28, %25 in 0 : vector<28x32xf32>, vector<4x32xf32> -> vector<32x32xf32>
    %30 = tpu.concatenate %27, %24, %29 in 1 : vector<32x32xf32>, vector<32x32xf32>, vector<32x32xf32> -> vector<32x96xf32>
    %c0_10 = arith.constant 0 : index
    %c0_11 = arith.constant 0 : index
    %31 = vector.load %arg4[%c0_10, %c0_11] : memref<96x32xf32, #tpu.memory_space<vmem>>, vector<96x32xf32>
    %cst_12 = arith.constant dense<0.000000e+00> : vector<32x32xf32>
    %32 = tpu.matmul %30, %31, %cst_12 {dimension_numbers = #tpu.dot_dimension_numbers<[1], [0], [0], [1], [0, 0, 1, 1], [], []>} : vector<32x96xf32>, vector<96x32xf32>, vector<32x32xf32> -> vector<32x32xf32>
    %c0_13 = arith.constant 0 : index
    %c0_14 = arith.constant 0 : index
    %33 = vector.load %arg5[%c0_13, %c0_14] : memref<1x32xf32, #tpu.memory_space<vmem>>, vector<1x32xf32>
    %34 = vector.broadcast %33 : vector<1x32xf32> to vector<32x32xf32>
    %35 = arith.addf %32, %34 : vector<32x32xf32>
    %cst_15 = arith.constant 0.000000e+00 : f32
    %36 = vector.broadcast %cst_15 : f32 to vector<32x32xf32>
    %37 = arith.maximumf %35, %36 : vector<32x32xf32>
    %cst_16 = arith.constant dense<0.000000e+00> : vector<32xf32>
    %38 = vector.multi_reduction <add>, %37, %cst_16 [1] : vector<32x32xf32> to vector<32xf32>
    %39 = vector.shape_cast %38 : vector<32xf32> to vector<32x1xf32>
    %cst_17 = arith.constant 3.200000e+01 : f32
    %40 = vector.broadcast %cst_17 : f32 to vector<32x1xf32>
    %41 = arith.divf %39, %40 : vector<32x1xf32>
    %42 = arith.mulf %37, %37 : vector<32x32xf32>
    %cst_18 = arith.constant dense<0.000000e+00> : vector<32xf32>
    %43 = vector.multi_reduction <add>, %42, %cst_18 [1] : vector<32x32xf32> to vector<32xf32>
    %44 = vector.shape_cast %43 : vector<32xf32> to vector<32x1xf32>
    %cst_19 = arith.constant 3.200000e+01 : f32
    %45 = vector.broadcast %cst_19 : f32 to vector<32x1xf32>
    %46 = arith.divf %44, %45 : vector<32x1xf32>
    %47 = arith.mulf %41, %41 : vector<32x1xf32>
    %48 = arith.subf %46, %47 : vector<32x1xf32>
    %cst_20 = arith.constant 9.99999974E-6 : f32
    %49 = vector.broadcast %cst_20 : f32 to vector<32x1xf32>
    %50 = arith.addf %48, %49 : vector<32x1xf32>
    %51 = math.rsqrt %50 : vector<32x1xf32>
    %52 = vector.broadcast %41 : vector<32x1xf32> to vector<32x32xf32>
    %53 = arith.subf %37, %52 : vector<32x32xf32>
    %54 = vector.broadcast %51 : vector<32x1xf32> to vector<32x32xf32>
    %55 = arith.mulf %53, %54 : vector<32x32xf32>
    %c0_21 = arith.constant 0 : index
    %c0_22 = arith.constant 0 : index
    %56 = vector.load %arg6[%c0_21, %c0_22] : memref<1x32xf32, #tpu.memory_space<vmem>>, vector<1x32xf32>
    %57 = vector.broadcast %56 : vector<1x32xf32> to vector<32x32xf32>
    %58 = arith.mulf %55, %57 : vector<32x32xf32>
    %c0_23 = arith.constant 0 : index
    %c0_24 = arith.constant 0 : index
    %59 = vector.load %arg7[%c0_23, %c0_24] : memref<1x32xf32, #tpu.memory_space<vmem>>, vector<1x32xf32>
    %60 = vector.broadcast %59 : vector<1x32xf32> to vector<32x32xf32>
    %61 = arith.addf %58, %60 : vector<32x32xf32>
    %cst_25 = arith.constant 0.000000e+00 : f32
    %62 = vector.broadcast %cst_25 : f32 to vector<4x32xf32>
    %63 = vector.extract_strided_slice %61 {offsets = [0, 0], sizes = [28, 32], strides = [1, 1]} : vector<32x32xf32> to vector<28x32xf32>
    %64 = tpu.concatenate %62, %63 in 0 : vector<4x32xf32>, vector<28x32xf32> -> vector<32x32xf32>
    %65 = vector.extract_strided_slice %61 {offsets = [4, 0], sizes = [28, 32], strides = [1, 1]} : vector<32x32xf32> to vector<28x32xf32>
    %66 = tpu.concatenate %65, %62 in 0 : vector<28x32xf32>, vector<4x32xf32> -> vector<32x32xf32>
    %67 = tpu.concatenate %64, %61, %66 in 1 : vector<32x32xf32>, vector<32x32xf32>, vector<32x32xf32> -> vector<32x96xf32>
    %c0_26 = arith.constant 0 : index
    %c0_27 = arith.constant 0 : index
    %68 = vector.load %arg8[%c0_26, %c0_27] : memref<96x32xf32, #tpu.memory_space<vmem>>, vector<96x32xf32>
    %cst_28 = arith.constant dense<0.000000e+00> : vector<32x32xf32>
    %69 = tpu.matmul %67, %68, %cst_28 {dimension_numbers = #tpu.dot_dimension_numbers<[1], [0], [0], [1], [0, 0, 1, 1], [], []>} : vector<32x96xf32>, vector<96x32xf32>, vector<32x32xf32> -> vector<32x32xf32>
    %c0_29 = arith.constant 0 : index
    %c0_30 = arith.constant 0 : index
    %70 = vector.load %arg9[%c0_29, %c0_30] : memref<1x32xf32, #tpu.memory_space<vmem>>, vector<1x32xf32>
    %71 = vector.broadcast %70 : vector<1x32xf32> to vector<32x32xf32>
    %72 = arith.addf %69, %71 : vector<32x32xf32>
    %cst_31 = arith.constant 0.000000e+00 : f32
    %73 = vector.broadcast %cst_31 : f32 to vector<32x32xf32>
    %74 = arith.maximumf %72, %73 : vector<32x32xf32>
    %cst_32 = arith.constant dense<0.000000e+00> : vector<32xf32>
    %75 = vector.multi_reduction <add>, %74, %cst_32 [1] : vector<32x32xf32> to vector<32xf32>
    %76 = vector.shape_cast %75 : vector<32xf32> to vector<32x1xf32>
    %cst_33 = arith.constant 3.200000e+01 : f32
    %77 = vector.broadcast %cst_33 : f32 to vector<32x1xf32>
    %78 = arith.divf %76, %77 : vector<32x1xf32>
    %79 = arith.mulf %74, %74 : vector<32x32xf32>
    %cst_34 = arith.constant dense<0.000000e+00> : vector<32xf32>
    %80 = vector.multi_reduction <add>, %79, %cst_34 [1] : vector<32x32xf32> to vector<32xf32>
    %81 = vector.shape_cast %80 : vector<32xf32> to vector<32x1xf32>
    %cst_35 = arith.constant 3.200000e+01 : f32
    %82 = vector.broadcast %cst_35 : f32 to vector<32x1xf32>
    %83 = arith.divf %81, %82 : vector<32x1xf32>
    %84 = arith.mulf %78, %78 : vector<32x1xf32>
    %85 = arith.subf %83, %84 : vector<32x1xf32>
    %cst_36 = arith.constant 9.99999974E-6 : f32
    %86 = vector.broadcast %cst_36 : f32 to vector<32x1xf32>
    %87 = arith.addf %85, %86 : vector<32x1xf32>
    %88 = math.rsqrt %87 : vector<32x1xf32>
    %89 = vector.broadcast %78 : vector<32x1xf32> to vector<32x32xf32>
    %90 = arith.subf %74, %89 : vector<32x32xf32>
    %91 = vector.broadcast %88 : vector<32x1xf32> to vector<32x32xf32>
    %92 = arith.mulf %90, %91 : vector<32x32xf32>
    %c0_37 = arith.constant 0 : index
    %c0_38 = arith.constant 0 : index
    %93 = vector.load %arg10[%c0_37, %c0_38] : memref<1x32xf32, #tpu.memory_space<vmem>>, vector<1x32xf32>
    %94 = vector.broadcast %93 : vector<1x32xf32> to vector<32x32xf32>
    %95 = arith.mulf %92, %94 : vector<32x32xf32>
    %c0_39 = arith.constant 0 : index
    %c0_40 = arith.constant 0 : index
    %96 = vector.load %arg11[%c0_39, %c0_40] : memref<1x32xf32, #tpu.memory_space<vmem>>, vector<1x32xf32>
    %97 = vector.broadcast %96 : vector<1x32xf32> to vector<32x32xf32>
    %98 = arith.addf %95, %97 : vector<32x32xf32>
    %cst_41 = arith.constant 0.000000e+00 : f32
    %99 = vector.broadcast %cst_41 : f32 to vector<4x32xf32>
    %100 = vector.extract_strided_slice %98 {offsets = [0, 0], sizes = [28, 32], strides = [1, 1]} : vector<32x32xf32> to vector<28x32xf32>
    %101 = tpu.concatenate %99, %100 in 0 : vector<4x32xf32>, vector<28x32xf32> -> vector<32x32xf32>
    %102 = vector.extract_strided_slice %98 {offsets = [4, 0], sizes = [28, 32], strides = [1, 1]} : vector<32x32xf32> to vector<28x32xf32>
    %103 = tpu.concatenate %102, %99 in 0 : vector<28x32xf32>, vector<4x32xf32> -> vector<32x32xf32>
    %104 = tpu.concatenate %101, %98, %103 in 1 : vector<32x32xf32>, vector<32x32xf32>, vector<32x32xf32> -> vector<32x96xf32>
    %c0_42 = arith.constant 0 : index
    %c0_43 = arith.constant 0 : index
    %105 = vector.load %arg12[%c0_42, %c0_43] : memref<96x32xf32, #tpu.memory_space<vmem>>, vector<96x32xf32>
    %cst_44 = arith.constant dense<0.000000e+00> : vector<32x32xf32>
    %106 = tpu.matmul %104, %105, %cst_44 {dimension_numbers = #tpu.dot_dimension_numbers<[1], [0], [0], [1], [0, 0, 1, 1], [], []>} : vector<32x96xf32>, vector<96x32xf32>, vector<32x32xf32> -> vector<32x32xf32>
    %c0_45 = arith.constant 0 : index
    %c0_46 = arith.constant 0 : index
    %107 = vector.load %arg13[%c0_45, %c0_46] : memref<1x32xf32, #tpu.memory_space<vmem>>, vector<1x32xf32>
    %108 = vector.broadcast %107 : vector<1x32xf32> to vector<32x32xf32>
    %109 = arith.addf %106, %108 : vector<32x32xf32>
    %c0_47 = arith.constant 0 : index
    %c0_48 = arith.constant 0 : index
    %110 = vector.load %arg14[%c0_47, %c0_48] : memref<32x32xf32, #tpu.memory_space<vmem>>, vector<32x32xf32>
    tpu.vector_store %arg14[%c0_47, %c0_48], %109 {strides = array<i32>} : memref<32x32xf32, #tpu.memory_space<vmem>>, vector<32x32xf32>,
    return
  }
  func.func @transform_0(%arg0: i32) -> (i32, i32) {
    %c0_i32 = arith.constant 0 : i32
    %c0_i32_0 = arith.constant 0 : i32
    return %arg0, %c0_i32 : i32, i32
  }
  func.func @transform_1(%arg0: i32) -> (i32, i32) {
    %c0_i32 = arith.constant 0 : i32
    %c0_i32_0 = arith.constant 0 : i32
    %c0_i32_1 = arith.constant 0 : i32
    return %c0_i32, %c0_i32_0 : i32, i32
  }
  func.func @transform_2(%arg0: i32) -> (i32, i32) {
    %c0_i32 = arith.constant 0 : i32
    %c0_i32_0 = arith.constant 0 : i32
    %c0_i32_1 = arith.constant 0 : i32
    return %c0_i32, %c0_i32_0 : i32, i32
  }
  func.func @transform_3(%arg0: i32) -> (i32, i32) {
    %c0_i32 = arith.constant 0 : i32
    %c0_i32_0 = arith.constant 0 : i32
    %c0_i32_1 = arith.constant 0 : i32
    return %c0_i32, %c0_i32_0 : i32, i32
  }
  func.func @transform_4(%arg0: i32) -> (i32, i32) {
    %c0_i32 = arith.constant 0 : i32
    %c0_i32_0 = arith.constant 0 : i32
    %c0_i32_1 = arith.constant 0 : i32
    return %c0_i32, %c0_i32_0 : i32, i32
  }
  func.func @transform_5(%arg0: i32) -> (i32, i32) {
    %c0_i32 = arith.constant 0 : i32
    %c0_i32_0 = arith.constant 0 : i32
    %c0_i32_1 = arith.constant 0 : i32
    return %c0_i32, %c0_i32_0 : i32, i32
  }
  func.func @transform_6(%arg0: i32) -> (i32, i32) {
    %c0_i32 = arith.constant 0 : i32
    %c0_i32_0 = arith.constant 0 : i32
    %c0_i32_1 = arith.constant 0 : i32
    return %c0_i32, %c0_i32_0 : i32, i32
  }
  func.func @transform_7(%arg0: i32) -> (i32, i32) {
    %c0_i32 = arith.constant 0 : i32
    %c0_i32_0 = arith.constant 0 : i32
    %c0_i32_1 = arith.constant 0 : i32
    return %c0_i32, %c0_i32_0 : i32, i32
  }
  func.func @transform_8(%arg0: i32) -> (i32, i32) {
    %c0_i32 = arith.constant 0 : i32
    %c0_i32_0 = arith.constant 0 : i32
    %c0_i32_1 = arith.constant 0 : i32
    return %c0_i32, %c0_i32_0 : i32, i32
  }
  func.func @transform_9(%arg0: i32) -> (i32, i32) {
    %c0_i32 = arith.constant 0 : i32
    %c0_i32_0 = arith.constant 0 : i32
    %c0_i32_1 = arith.constant 0 : i32
    return %c0_i32, %c0_i32_0 : i32, i32
  }
  func.func @transform_10(%arg0: i32) -> (i32, i32) {
    %c0_i32 = arith.constant 0 : i32
    %c0_i32_0 = arith.constant 0 : i32
    %c0_i32_1 = arith.constant 0 : i32
    return %c0_i32, %c0_i32_0 : i32, i32
  }
  func.func @transform_11(%arg0: i32) -> (i32, i32) {
    %c0_i32 = arith.constant 0 : i32
    %c0_i32_0 = arith.constant 0 : i32
    %c0_i32_1 = arith.constant 0 : i32
    return %c0_i32, %c0_i32_0 : i32, i32
  }
  func.func @transform_12(%arg0: i32) -> (i32, i32) {
    %c0_i32 = arith.constant 0 : i32
    %c0_i32_0 = arith.constant 0 : i32
    %c0_i32_1 = arith.constant 0 : i32
    return %c0_i32, %c0_i32_0 : i32, i32
  }
  func.func @transform_13(%arg0: i32) -> (i32, i32) {
    %c0_i32 = arith.constant 0 : i32
    %c0_i32_0 = arith.constant 0 : i32
    return %arg0, %c0_i32 : i32, i32
  }
}

</mosaic_0001>

<llo_original>
// kernel: tpu_custom_call.1
$region0: #{tpu_custom_call.1}
  #allocation0 [shape = 'u32[]', space=smem, size = 0x4, offset = 0x4, fixed_abs, tag = 'smem constant byte address 0x4 - core index']
  #allocation1 [shape = 'u32[144,128]{1,0:T(1,128)}', space=vmem, size = 0x12000, scoped, tag = 'internal scratch']
  %s0 = inlined_call_operand.hbm [shape: f32[8,128], index: 0, kind: input, shape index: {}]
  %s1 = inlined_call_operand.hbm [shape: f32[8,128], index: 1, kind: output, shape index: {}]
  %s2 = sld [smem:[#allocation0]]
  $region18: #{tpu_custom_call.1} parent=0
    _
  %s4 = ssub.s32 1, %s2
  %s5 = scalar_select 0, %s4, %s2
  $region1: #{tpu_custom_call.1} parent=0
    #allocation2 [shape = 'u8[4096]{0}', space=vmem, size = 0x1000, scoped, tag = 'input window, operand 0, single buffered']
    #allocation3 [shape = 's32[1]{0}', space=sflag, size = 0x4, scoped, tag = 'scoped memory for tpu_custom_call.1']
    #allocation4 [shape = 's32[1]{0}', space=sflag, size = 0x4, scoped, tag = 'scoped memory for tpu_custom_call.1']
    #allocation5 [shape = 'u8[4096]{0}', space=vmem, size = 0x1000, scoped, tag = 'output window, operand 0, single buffered']
    %6 = vsyncpa [#allocation3], 0
    %7 = vsyncpa [#allocation4], 0
    // Predicated region
    $region2: #{tpu_custom_call.1} parent=1 // pred_check
      _
    $region3: #{tpu_custom_call.1} parent=1 // pred_check_branch
      %9 = sbr.rel (0) target = $region5
    $region4: #{tpu_custom_call.1} parent=1 // pred_region
      %s11 = ssub.s32 128, 128
      %12 = vsyncadd [#allocation3], %s11
      %s14 = sshll.u32 [#allocation2], 4
      %s15 = int_to_ptr.vmem [resolvable:$true] %s14
      %17 = dma.hbm_to_vmem [thread:$0]  %s0, 128, %s15, [#allocation3]
    $region5: #{tpu_custom_call.1} parent=1 // pred_fallthru
      _
    // Predicated region
    $region6: #{tpu_custom_call.1} parent=1 // pred_check
      _
    $region7: #{tpu_custom_call.1} parent=1 // pred_check_branch
      %19 = sbr.rel (0) target = $region9
    $region8: #{tpu_custom_call.1} parent=1 // pred_region
      %20 = dma.done [#allocation3], 128
    $region9: #{tpu_custom_call.1} parent=1 // pred_fallthru
      _
    %v21 = vld [vmem:[#allocation2] sm:$0xff]
    %v22 = vrot.slane %v21, 7
    %23 = vst [vmem:[#allocation5] sm:$0xff] %v22
    // Predicated region
    $region10: #{tpu_custom_call.1} parent=1 // pred_check
      _
    $region11: #{tpu_custom_call.1} parent=1 // pred_check_branch
      %25 = sbr.rel (0) target = $region13
    $region12: #{tpu_custom_call.1} parent=1 // pred_region
      %s27 = ssub.s32 128, 128
      %28 = vsyncadd [#allocation4], %s27
      %s30 = sshll.u32 [#allocation5], 4
      %s31 = int_to_ptr.vmem [resolvable:$true] %s30
      %33 = dma.vmem_to_hbm [thread:$0]  %s31, 128, %s1, [#allocation4]
    $region13: #{tpu_custom_call.1} parent=1 // pred_fallthru
      _
    // Predicated region
    $region14: #{tpu_custom_call.1} parent=1 // pred_check
      _
    $region15: #{tpu_custom_call.1} parent=1 // pred_check_branch
      %35 = sbr.rel (0) target = $region17
    $region16: #{tpu_custom_call.1} parent=1 // pred_region
      %36 = dma.done [#allocation4], 128
    $region17: #{tpu_custom_call.1} parent=1 // pred_fallthru
      _
    %37 = vsyncpa [#allocation3], 1
    %38 = vsyncpa [#allocation4], 1

// kernel: tpu_custom_call.1
$region0: #{tpu_custom_call.1}
  #allocation0 [shape = 'u32[]', space=smem, size = 0x4, offset = 0x4, fixed_abs, tag = 'smem constant byte address 0x4 - core index']
  #allocation1 [shape = 'u32[144,128]{1,0:T(1,128)}', space=vmem, size = 0x12000, scoped, tag = 'internal scratch']
  %s0 = inlined_call_operand.vmem [shape: f32[64,32], index: 0, kind: input, shape index: {}]
  %s1 = inlined_call_operand.vmem [shape: f32[1,32], index: 1, kind: input, shape index: {}]
  %s2 = inlined_call_operand.vmem [shape: f32[1,32], index: 2, kind: input, shape index: {}]
  %s3 = inlined_call_operand.vmem [shape: f32[96,32], index: 3, kind: input, shape index: {}]
  %s4 = inlined_call_operand.vmem [shape: f32[1,32], index: 4, kind: input, shape index: {}]
  %s5 = inlined_call_operand.vmem [shape: f32[1,32], index: 5, kind: input, shape index: {}]
  %s6 = inlined_call_operand.vmem [shape: f32[1,32], index: 6, kind: input, shape index: {}]
  %s7 = inlined_call_operand.vmem [shape: f32[96,32], index: 7, kind: input, shape index: {}]
  %s8 = inlined_call_operand.vmem [shape: f32[1,32], index: 8, kind: input, shape index: {}]
  %s9 = inlined_call_operand.vmem [shape: f32[1,32], index: 9, kind: input, shape index: {}]
  %s10 = inlined_call_operand.vmem [shape: f32[1,32], index: 10, kind: input, shape index: {}]
  %s11 = inlined_call_operand.vmem [shape: f32[96,32], index: 11, kind: input, shape index: {}]
  %s12 = inlined_call_operand.vmem [shape: f32[1,32], index: 12, kind: input, shape index: {}]
  %s13 = inlined_call_operand.vmem [shape: f32[64,32], index: 13, kind: output, shape index: {}]
  %s14 = sld [smem:[#allocation0]]
  $region85: #{tpu_custom_call.1} parent=0
    _
  %s16 = ssub.s32 1, %s14
  %s17 = scalar_select 0, %s16, %s14
  loop: start=0, step=1, limit=4
  $region2: #{tpu_custom_call.1} parent=0 // loop_pre_header
    _
  $region3: #{tpu_custom_call.1} parent=0 // loop_header
    %s19 = sphi 0, %s23
    %p20 = scmp.ge.s32.totalorder %s19, 4
    %s29 = sphi 0, %s31
    %s32 = sphi 0, %s29
    %s33 = sphi 0, %s32
    %s49 = sphi 0, %s33
    %s53 = sphi 0, %s53
    %s55 = sphi 0, %s53
    %s56 = sphi 0, %s55
    %s70 = sphi 0, %s56
    %s74 = sphi 0, %s74
    %s76 = sphi 0, %s74
    %s77 = sphi 0, %s76
    %s91 = sphi 0, %s77
    %s95 = sphi 0, %s95
    %s97 = sphi 0, %s95
    %s98 = sphi 0, %s97
    %s112 = sphi 0, %s98
    %s116 = sphi 0, %s116
    %s118 = sphi 0, %s116
    %s119 = sphi 0, %s118
    %s133 = sphi 0, %s119
    %s137 = sphi 0, %s137
    %s139 = sphi 0, %s137
    %s140 = sphi 0, %s139
    %s154 = sphi 0, %s140
    %s158 = sphi 0, %s158
    %s160 = sphi 0, %s158
    %s161 = sphi 0, %s160
    %s175 = sphi 0, %s161
    %s179 = sphi 0, %s179
    %s181 = sphi 0, %s179
    %s182 = sphi 0, %s181
    %s196 = sphi 0, %s182
    %s200 = sphi 0, %s200
    %s202 = sphi 0, %s200
    %s203 = sphi 0, %s202
    %s217 = sphi 0, %s203
    %s221 = sphi 0, %s221
    %s223 = sphi 0, %s221
    %s224 = sphi 0, %s223
    %s238 = sphi 0, %s224
    %s242 = sphi 0, %s242
    %s244 = sphi 0, %s242
    %s245 = sphi 0, %s244
    %s259 = sphi 0, %s245
    %s263 = sphi 0, %s263
    %s265 = sphi 0, %s263
    %s266 = sphi 0, %s265
    %s280 = sphi 0, %s266
    %s284 = sphi 0, %s284
    %s286 = sphi 0, %s284
    %s287 = sphi 0, %s286
    %s301 = sphi 0, %s287
    %s307 = sphi 0, %s309
    %s310 = sphi 0, %s307
    %s311 = sphi 0, %s310
    %s327 = sphi 0, %s311
  $region4: #{tpu_custom_call.1} parent=0 // loop_header_branch
    %22 = sbr.rel (%p20) target = $region8
  $region5: #{tpu_custom_call.1} parent=0 // loop_body
    %s24 = ssub.s32 %s19, 1
    %s25 = ssub.s32 %s19, 2
    %s26 = sadd.s32 %s19, 1
    %s27 = ssub.s32 %s19, %s26
    %p28 = scmp.eq.s32.totalorder %s27, 0
    %s30 = sadd.s32 %s29, 1
    %s31 = scalar_select %p28, %s29, %s30
    %p34 = pneg %p28
    %p35 = scmp.eq.s32.totalorder %s19, 1
    %p36 = por %p34, %p35
    %p37 = scmp.ne.s32.totalorder %s29, %s32
    %p38 = scmp.eq.s32.totalorder %s19, 0
    %p39 = por %p37, %p38
    %p40 = scmp.ne.s32.totalorder %s29, %s32
    %p41 = scmp.eq.s32.totalorder %s24, 1
    %p42 = por %p40, %p41
    %p43 = scmp.ne.s32.totalorder %s32, %s33
    %p44 = scmp.eq.s32.totalorder %s24, 0
    %p45 = por %p43, %p44
    %p46 = scmp.ne.s32.totalorder %s32, %s33
    %p47 = scmp.eq.s32.totalorder %s25, 1
    %p48 = por %p46, %p47
    %p50 = scmp.ne.s32.totalorder %s33, %s49
    %p51 = scmp.eq.s32.totalorder %s25, 0
    %p52 = por %p50, %p51
    %s54 = sadd.s32 %s53, 1
    %p57 = scmp.eq.s32.totalorder %s19, 1
    %p58 = scmp.ne.s32.totalorder %s53, %s55
    %p59 = scmp.eq.s32.totalorder %s19, 0
    %p60 = por %p58, %p59
    %p61 = scmp.ne.s32.totalorder %s53, %s55
    %p62 = scmp.eq.s32.totalorder %s24, 1
    %p63 = por %p61, %p62
    %p64 = scmp.ne.s32.totalorder %s55, %s56
    %p65 = scmp.eq.s32.totalorder %s24, 0
    %p66 = por %p64, %p65
    %p67 = scmp.ne.s32.totalorder %s55, %s56
    %p68 = scmp.eq.s32.totalorder %s25, 1
    %p69 = por %p67, %p68
    %p71 = scmp.ne.s32.totalorder %s56, %s70
    %p72 = scmp.eq.s32.totalorder %s25, 0
    %p73 = por %p71, %p72
    %s75 = sadd.s32 %s74, 1
    %p78 = scmp.eq.s32.totalorder %s19, 1
    %p79 = scmp.ne.s32.totalorder %s74, %s76
    %p80 = scmp.eq.s32.totalorder %s19, 0
    %p81 = por %p79, %p80
    %p82 = scmp.ne.s32.totalorder %s74, %s76
    %p83 = scmp.eq.s32.totalorder %s24, 1
    %p84 = por %p82, %p83
    %p85 = scmp.ne.s32.totalorder %s76, %s77
    %p86 = scmp.eq.s32.totalorder %s24, 0
    %p87 = por %p85, %p86
    %p88 = scmp.ne.s32.totalorder %s76, %s77
    %p89 = scmp.eq.s32.totalorder %s25, 1
    %p90 = por %p88, %p89
    %p92 = scmp.ne.s32.totalorder %s77, %s91
    %p93 = scmp.eq.s32.totalorder %s25, 0
    %p94 = por %p92, %p93
    %s96 = sadd.s32 %s95, 1
    %p99 = scmp.eq.s32.totalorder %s19, 1
    %p100 = scmp.ne.s32.totalorder %s95, %s97
    %p101 = scmp.eq.s32.totalorder %s19, 0
    %p102 = por %p100, %p101
    %p103 = scmp.ne.s32.totalorder %s95, %s97
    %p104 = scmp.eq.s32.totalorder %s24, 1
    %p105 = por %p103, %p104
    %p106 = scmp.ne.s32.totalorder %s97, %s98
    %p107 = scmp.eq.s32.totalorder %s24, 0
    %p108 = por %p106, %p107
    %p109 = scmp.ne.s32.totalorder %s97, %s98
    %p110 = scmp.eq.s32.totalorder %s25, 1
    %p111 = por %p109, %p110
    %p113 = scmp.ne.s32.totalorder %s98, %s112
    %p114 = scmp.eq.s32.totalorder %s25, 0
    %p115 = por %p113, %p114
    %s117 = sadd.s32 %s116, 1
    %p120 = scmp.eq.s32.totalorder %s19, 1
    %p121 = scmp.ne.s32.totalorder %s116, %s118
    %p122 = scmp.eq.s32.totalorder %s19, 0
    %p123 = por %p121, %p122
    %p124 = scmp.ne.s32.totalorder %s116, %s118
    %p125 = scmp.eq.s32.totalorder %s24, 1
    %p126 = por %p124, %p125
    %p127 = scmp.ne.s32.totalorder %s118, %s119
    %p128 = scmp.eq.s32.totalorder %s24, 0
    %p129 = por %p127, %p128
    %p130 = scmp.ne.s32.totalorder %s118, %s119
    %p131 = scmp.eq.s32.totalorder %s25, 1
    %p132 = por %p130, %p131
    %p134 = scmp.ne.s32.totalorder %s119, %s133
    %p135 = scmp.eq.s32.totalorder %s25, 0
    %p136 = por %p134, %p135
    %s138 = sadd.s32 %s137, 1
    %p141 = scmp.eq.s32.totalorder %s19, 1
    %p142 = scmp.ne.s32.totalorder %s137, %s139
    %p143 = scmp.eq.s32.totalorder %s19, 0
    %p144 = por %p142, %p143
    %p145 = scmp.ne.s32.totalorder %s137, %s139
    %p146 = scmp.eq.s32.totalorder %s24, 1
    %p147 = por %p145, %p146
    %p148 = scmp.ne.s32.totalorder %s139, %s140
    %p149 = scmp.eq.s32.totalorder %s24, 0
    %p150 = por %p148, %p149
    %p151 = scmp.ne.s32.totalorder %s139, %s140
    %p152 = scmp.eq.s32.totalorder %s25, 1
    %p153 = por %p151, %p152
    %p155 = scmp.ne.s32.totalorder %s140, %s154
    %p156 = scmp.eq.s32.totalorder %s25, 0
    %p157 = por %p155, %p156
    %s159 = sadd.s32 %s158, 1
    %p162 = scmp.eq.s32.totalorder %s19, 1
    %p163 = scmp.ne.s32.totalorder %s158, %s160
    %p164 = scmp.eq.s32.totalorder %s19, 0
    %p165 = por %p163, %p164
    %p166 = scmp.ne.s32.totalorder %s158, %s160
    %p167 = scmp.eq.s32.totalorder %s24, 1
    %p168 = por %p166, %p167
    %p169 = scmp.ne.s32.totalorder %s160, %s161
    %p170 = scmp.eq.s32.totalorder %s24, 0
    %p171 = por %p169, %p170
    %p172 = scmp.ne.s32.totalorder %s160, %s161
    %p173 = scmp.eq.s32.totalorder %s25, 1
    %p174 = por %p172, %p173
    %p176 = scmp.ne.s32.totalorder %s161, %s175
    %p177 = scmp.eq.s32.totalorder %s25, 0
    %p178 = por %p176, %p177
    %s180 = sadd.s32 %s179, 1
    %p183 = scmp.eq.s32.totalorder %s19, 1
    %p184 = scmp.ne.s32.totalorder %s179, %s181
    %p185 = scmp.eq.s32.totalorder %s19, 0
    %p186 = por %p184, %p185
    %p187 = scmp.ne.s32.totalorder %s179, %s181
    %p188 = scmp.eq.s32.totalorder %s24, 1
    %p189 = por %p187, %p188
    %p190 = scmp.ne.s32.totalorder %s181, %s182
    %p191 = scmp.eq.s32.totalorder %s24, 0
    %p192 = por %p190, %p191
    %p193 = scmp.ne.s32.totalorder %s181, %s182
    %p194 = scmp.eq.s32.totalorder %s25, 1
    %p195 = por %p193, %p194
    %p197 = scmp.ne.s32.totalorder %s182, %s196
    %p198 = scmp.eq.s32.totalorder %s25, 0
    %p199 = por %p197, %p198
    %s201 = sadd.s32 %s200, 1
    %p204 = scmp.eq.s32.totalorder %s19, 1
    %p205 = scmp.ne.s32.totalorder %s200, %s202
    %p206 = scmp.eq.s32.totalorder %s19, 0
    %p207 = por %p205, %p206
    %p208 = scmp.ne.s32.totalorder %s200, %s202
    %p209 = scmp.eq.s32.totalorder %s24, 1
    %p210 = por %p208, %p209
    %p211 = scmp.ne.s32.totalorder %s202, %s203
    %p212 = scmp.eq.s32.totalorder %s24, 0
    %p213 = por %p211, %p212
    %p214 = scmp.ne.s32.totalorder %s202, %s203
    %p215 = scmp.eq.s32.totalorder %s25, 1
    %p216 = por %p214, %p215
    %p218 = scmp.ne.s32.totalorder %s203, %s217
    %p219 = scmp.eq.s32.totalorder %s25, 0
    %p220 = por %p218, %p219
    %s222 = sadd.s32 %s221, 1
    %p225 = scmp.eq.s32.totalorder %s19, 1
    %p226 = scmp.ne.s32.totalorder %s221, %s223
    %p227 = scmp.eq.s32.totalorder %s19, 0
    %p228 = por %p226, %p227
    %p229 = scmp.ne.s32.totalorder %s221, %s223
    %p230 = scmp.eq.s32.totalorder %s24, 1
    %p231 = por %p229, %p230
    %p232 = scmp.ne.s32.totalorder %s223, %s224
    %p233 = scmp.eq.s32.totalorder %s24, 0
    %p234 = por %p232, %p233
    %p235 = scmp.ne.s32.totalorder %s223, %s224
    %p236 = scmp.eq.s32.totalorder %s25, 1
    %p237 = por %p235, %p236
    %p239 = scmp.ne.s32.totalorder %s224, %s238
    %p240 = scmp.eq.s32.totalorder %s25, 0
    %p241 = por %p239, %p240
    %s243 = sadd.s32 %s242, 1
    %p246 = scmp.eq.s32.totalorder %s19, 1
    %p247 = scmp.ne.s32.totalorder %s242, %s244
    %p248 = scmp.eq.s32.totalorder %s19, 0
    %p249 = por %p247, %p248
    %p250 = scmp.ne.s32.totalorder %s242, %s244
    %p251 = scmp.eq.s32.totalorder %s24, 1
    %p252 = por %p250, %p251
    %p253 = scmp.ne.s32.totalorder %s244, %s245
    %p254 = scmp.eq.s32.totalorder %s24, 0
    %p255 = por %p253, %p254
    %p256 = scmp.ne.s32.totalorder %s244, %s245
    %p257 = scmp.eq.s32.totalorder %s25, 1
    %p258 = por %p256, %p257
    %p260 = scmp.ne.s32.totalorder %s245, %s259
    %p261 = scmp.eq.s32.totalorder %s25, 0
    %p262 = por %p260, %p261
    %s264 = sadd.s32 %s263, 1
    %p267 = scmp.eq.s32.totalorder %s19, 1
    %p268 = scmp.ne.s32.totalorder %s263, %s265
    %p269 = scmp.eq.s32.totalorder %s19, 0
    %p270 = por %p268, %p269
    %p271 = scmp.ne.s32.totalorder %s263, %s265
    %p272 = scmp.eq.s32.totalorder %s24, 1
    %p273 = por %p271, %p272
    %p274 = scmp.ne.s32.totalorder %s265, %s266
    %p275 = scmp.eq.s32.totalorder %s24, 0
    %p276 = por %p274, %p275
    %p277 = scmp.ne.s32.totalorder %s265, %s266
    %p278 = scmp.eq.s32.totalorder %s25, 1
    %p279 = por %p277, %p278
    %p281 = scmp.ne.s32.totalorder %s266, %s280
    %p282 = scmp.eq.s32.totalorder %s25, 0
    %p283 = por %p281, %p282
    %s285 = sadd.s32 %s284, 1
    %p288 = scmp.eq.s32.totalorder %s19, 1
    %p289 = scmp.ne.s32.totalorder %s284, %s286
    %p290 = scmp.eq.s32.totalorder %s19, 0
    %p291 = por %p289, %p290
    %p292 = scmp.ne.s32.totalorder %s284, %s286
    %p293 = scmp.eq.s32.totalorder %s24, 1
    %p294 = por %p292, %p293
    %p295 = scmp.ne.s32.totalorder %s286, %s287
    %p296 = scmp.eq.s32.totalorder %s24, 0
    %p297 = por %p295, %p296
    %p298 = scmp.ne.s32.totalorder %s286, %s287
    %p299 = scmp.eq.s32.totalorder %s25, 1
    %p300 = por %p298, %p299
    %p302 = scmp.ne.s32.totalorder %s287, %s301
    %p303 = scmp.eq.s32.totalorder %s25, 0
    %p304 = por %p302, %p303
    %s305 = ssub.s32 %s19, %s26
    %p306 = scmp.eq.s32.totalorder %s305, 0
    %s308 = sadd.s32 %s307, 1
    %s309 = scalar_select %p306, %s307, %s308
    %p312 = pneg %p306
    %p313 = scmp.eq.s32.totalorder %s19, 1
    %p314 = por %p312, %p313
    %p315 = scmp.ne.s32.totalorder %s307, %s310
    %p316 = scmp.eq.s32.totalorder %s19, 0
    %p317 = por %p315, %p316
    %p318 = scmp.ne.s32.totalorder %s307, %s310
    %p319 = scmp.eq.s32.totalorder %s24, 1
    %p320 = por %p318, %p319
    %p321 = scmp.ne.s32.totalorder %s310, %s311
    %p322 = scmp.eq.s32.totalorder %s24, 0
    %p323 = por %p321, %p322
    %p324 = scmp.ne.s32.totalorder %s310, %s311
    %p325 = scmp.eq.s32.totalorder %s25, 1
    %p326 = por %p324, %p325
    %p328 = scmp.ne.s32.totalorder %s311, %s327
    %p329 = scmp.eq.s32.totalorder %s25, 0
    %p330 = por %p328, %p329
    %p331 = scmp.le.s32.totalorder 1, %s19
    %p332 = scmp.lt.s32.totalorder %s19, 3
    %p333 = pnand %p331, %p332
    %p334 = pneg %p333
    // Predicated region
    $region9: #{tpu_custom_call.1} parent=5 // pred_check
      _
    $region10: #{tpu_custom_call.1} parent=5 // pred_check_branch
      %336 = sbr.rel (%p333) target = $region12
    $region11: #{tpu_custom_call.1} parent=5 // pred_region
      %s337 = ssub.s32 %s19, 1
      // Predicated region
      $region13: #{tpu_custom_call.1} parent=11 // pred_check
        %p338 = pneg %p66
      $region14: #{tpu_custom_call.1} parent=11 // pred_check_branch
        %340 = sbr.rel (%p338) target = $region16
      $region15: #{tpu_custom_call.1} parent=11 // pred_region
        _
      $region16: #{tpu_custom_call.1} parent=11 // pred_fallthru
        _
      // Predicated region
      $region17: #{tpu_custom_call.1} parent=11 // pred_check
        %p341 = pneg %p87
      $region18: #{tpu_custom_call.1} parent=11 // pred_check_branch
        %343 = sbr.rel (%p341) target = $region20
      $region19: #{tpu_custom_call.1} parent=11 // pred_region
        _
      $region20: #{tpu_custom_call.1} parent=11 // pred_fallthru
        _
      // Predicated region
      $region21: #{tpu_custom_call.1} parent=11 // pred_check
        %p344 = pneg %p108
      $region22: #{tpu_custom_call.1} parent=11 // pred_check_branch
        %346 = sbr.rel (%p344) target = $region24
      $region23: #{tpu_custom_call.1} parent=11 // pred_region
        _
      $region24: #{tpu_custom_call.1} parent=11 // pred_fallthru
        _
      // Predicated region
      $region25: #{tpu_custom_call.1} parent=11 // pred_check
        %p347 = pneg %p129
      $region26: #{tpu_custom_call.1} parent=11 // pred_check_branch
        %349 = sbr.rel (%p347) target = $region28
      $region27: #{tpu_custom_call.1} parent=11 // pred_region
        _
      $region28: #{tpu_custom_call.1} parent=11 // pred_fallthru
        _
      // Predicated region
      $region29: #{tpu_custom_call.1} parent=11 // pred_check
        %p350 = pneg %p150
      $region30: #{tpu_custom_call.1} parent=11 // pred_check_branch
        %352 = sbr.rel (%p350) target = $region32
      $region31: #{tpu_custom_call.1} parent=11 // pred_region
        _
      $region32: #{tpu_custom_call.1} parent=11 // pred_fallthru
        _
      // Predicated region
      $region33: #{tpu_custom_call.1} parent=11 // pred_check
        %p353 = pneg %p171
      $region34: #{tpu_custom_call.1} parent=11 // pred_check_branch
        %355 = sbr.rel (%p353) target = $region36
      $region35: #{tpu_custom_call.1} parent=11 // pred_region
        _
      $region36: #{tpu_custom_call.1} parent=11 // pred_fallthru
        _
      // Predicated region
      $region37: #{tpu_custom_call.1} parent=11 // pred_check
        %p356 = pneg %p192
      $region38: #{tpu_custom_call.1} parent=11 // pred_check_branch
        %358 = sbr.rel (%p356) target = $region40
      $region39: #{tpu_custom_call.1} parent=11 // pred_region
        _
      $region40: #{tpu_custom_call.1} parent=11 // pred_fallthru
        _
      // Predicated region
      $region41: #{tpu_custom_call.1} parent=11 // pred_check
        %p359 = pneg %p213
      $region42: #{tpu_custom_call.1} parent=11 // pred_check_branch
        %361 = sbr.rel (%p359) target = $region44
      $region43: #{tpu_custom_call.1} parent=11 // pred_region
        _
      $region44: #{tpu_custom_call.1} parent=11 // pred_fallthru
        _
      // Predicated region
      $region45: #{tpu_custom_call.1} parent=11 // pred_check
        %p362 = pneg %p234
      $region46: #{tpu_custom_call.1} parent=11 // pred_check_branch
        %364 = sbr.rel (%p362) target = $region48
      $region47: #{tpu_custom_call.1} parent=11 // pred_region
        _
      $region48: #{tpu_custom_call.1} parent=11 // pred_fallthru
        _
      // Predicated region
      $region49: #{tpu_custom_call.1} parent=11 // pred_check
        %p365 = pneg %p255
      $region50: #{tpu_custom_call.1} parent=11 // pred_check_branch
        %367 = sbr.rel (%p365) target = $region52
      $region51: #{tpu_custom_call.1} parent=11 // pred_region
        _
      $region52: #{tpu_custom_call.1} parent=11 // pred_fallthru
        _
      // Predicated region
      $region53: #{tpu_custom_call.1} parent=11 // pred_check
        %p368 = pneg %p276
      $region54: #{tpu_custom_call.1} parent=11 // pred_check_branch
        %370 = sbr.rel (%p368) target = $region56
      $region55: #{tpu_custom_call.1} parent=11 // pred_region
        _
      $region56: #{tpu_custom_call.1} parent=11 // pred_fallthru
        _
      // Predicated region
      $region57: #{tpu_custom_call.1} parent=11 // pred_check
        %p371 = pneg %p297
      $region58: #{tpu_custom_call.1} parent=11 // pred_check_branch
        %373 = sbr.rel (%p371) target = $region60
      $region59: #{tpu_custom_call.1} parent=11 // pred_region
        _
      $region60: #{tpu_custom_call.1} parent=11 // pred_fallthru
        _
    $region12: #{tpu_custom_call.1} parent=5 // pred_fallthru
      _
    %p374 = scmp.lt.s32.totalorder %s19, 2
    // Predicated region
    $region61: #{tpu_custom_call.1} parent=5 // pred_check
      %p375 = pneg %p374
    $region62: #{tpu_custom_call.1} parent=5 // pred_check_branch
      %377 = sbr.rel (%p375) target = $region64
    $region63: #{tpu_custom_call.1} parent=5 // pred_region
      // Predicated region
      $region65: #{tpu_custom_call.1} parent=63 // pred_check
        %p378 = pneg %p39
      $region66: #{tpu_custom_call.1} parent=63 // pred_check_branch
        %380 = sbr.rel (%p378) target = $region68
      $region67: #{tpu_custom_call.1} parent=63 // pred_region
        %s381 = smul.u32 4, %s19
        %p382 = scmp.lt.s32.totalorder %s381, 7
        %s383 = scalar_select %p382, %s381, 7
        %s384 = smul.addr %s383, 8
        %s385 = scalar_lea.vmem %s0, %s384
        %s386 = smul.u32 4, %s19
      $region68: #{tpu_custom_call.1} parent=63 // pred_fallthru
        _
    $region64: #{tpu_custom_call.1} parent=5 // pred_fallthru
      _
    %p387 = scmp.le.s32.totalorder 1, %s19
    %p388 = scmp.lt.s32.totalorder %s19, 3
    %p389 = pnand %p387, %p388
    %p390 = pneg %p389
    // Predicated region
    $region69: #{tpu_custom_call.1} parent=5 // pred_check
      _
    $region70: #{tpu_custom_call.1} parent=5 // pred_check_branch
      %392 = sbr.rel (%p389) target = $region72
    $region71: #{tpu_custom_call.1} parent=5 // pred_region
      %s393 = ssub.s32 %s19, 1
      %s394 = smul.u32 4, %s24
      %p395 = scmp.lt.s32.totalorder %s394, 7
      %s396 = scalar_select %p395, %s394, 7
      %s397 = smul.addr %s396, 8
      %s398 = scalar_lea.vmem %s0, %s397
      %p399 = pneg %p45
      %p400 = pneg %p42
      %p401 = pneg %p66
      %p402 = pneg %p63
      %p403 = pneg %p87
      %p404 = pneg %p84
      %p405 = pneg %p108
      %p406 = pneg %p105
      %p407 = pneg %p129
      %p408 = pneg %p126
      %p409 = pneg %p150
      %p410 = pneg %p147
      %p411 = pneg %p171
      %p412 = pneg %p168
      %p413 = pneg %p192
      %p414 = pneg %p189
      %p415 = pneg %p213
      %p416 = pneg %p210
      %p417 = pneg %p234
      %p418 = pneg %p231
      %p419 = pneg %p255
      %p420 = pneg %p252
      %p421 = pneg %p276
      %p422 = pneg %p273
      %p423 = pneg %p297
      %p424 = pneg %p294
      %p425 = pneg %p323
      %p426 = pneg %p320
      %s427 = smul.u32 4, %s24
      %p428 = scmp.lt.s32.totalorder %s427, 7
      %s429 = scalar_select %p428, %s427, 7
      %s430 = smul.addr %s429, 8
      %s431 = scalar_lea.vmem %s13, %s430
      %s432 = smul.u32 4, %s24
      %p433 = scmp.lt.s32.totalorder %s432, 7
      %s434 = scalar_select %p433, %s432, 7
      %s435 = smul.addr %s434, 8
      %s436 = scalar_lea.vmem %s0, %s435
      %s437 = smul.u32 4, %s24
      %s438 = smul.u32 4, %s24
      %p439 = scmp.lt.s32.totalorder %s438, 7
      %s440 = scalar_select %p439, %s438, 7
      %s441 = smul.addr %s440, 8
      %s442 = scalar_lea.vmem %s13, %s441
      %s443 = smul.u32 4, %s24
      %v444 = vld [vmem:[%s436] sm:$0xff]
      %v445 = vld [vmem:[%s436 + $0x8] sm:$0xff]
      %v446 = vld [vmem:[%s436 + $0x10] sm:$0xff]
      %v447 = vld [vmem:[%s436 + $0x18] sm:$0xff]
      %vm448 = vcmask 261120
      %v449 = vsel %vm448, %v444, 0.0
      %450 = vadd.xlane.f32.xlu0 %v449
      %v451 = vpop.xlane.xlu0 %450
      %v452 = vsel %vm448, %v445, 0.0
      %453 = vadd.xlane.f32.xlu0 %v452
      %v454 = vpop.xlane.xlu0 %453
      %v455 = vsel %vm448, %v446, 0.0
      %456 = vadd.xlane.f32.xlu0 %v455
      %v457 = vpop.xlane.xlu0 %456
      %v458 = vsel %vm448, %v447, 0.0
      %459 = vadd.xlane.f32.xlu0 %v458
      %v460 = vpop.xlane.xlu0 %459
      %v461 = vrcp.pop 32.0
      %v462 = vmul.f32 %v451, %v461
      %v463 = vmul.f32 %v454, %v461
      %v464 = vmul.f32 %v457, %v461
      %v465 = vmul.f32 %v460, %v461
      %v466 = vmul.f32 %v444, %v444
      %v467 = vmul.f32 %v445, %v445
      %v468 = vmul.f32 %v446, %v446
      %v469 = vmul.f32 %v447, %v447
      %v470 = vsel %vm448, %v466, 0.0
      %471 = vadd.xlane.f32.xlu0 %v470
      %v472 = vpop.xlane.xlu0 %471
      %v473 = vsel %vm448, %v467, 0.0
      %474 = vadd.xlane.f32.xlu0 %v473
      %v475 = vpop.xlane.xlu0 %474
      %v476 = vsel %vm448, %v468, 0.0
      %477 = vadd.xlane.f32.xlu0 %v476
      %v478 = vpop.xlane.xlu0 %477
      %v479 = vsel %vm448, %v469, 0.0
      %480 = vadd.xlane.f32.xlu0 %v479
      %v481 = vpop.xlane.xlu0 %480
      %v482 = vmul.f32 %v472, %v461
      %v483 = vmul.f32 %v475, %v461
      %v484 = vmul.f32 %v478, %v461
      %v485 = vmul.f32 %v481, %v461
      %v486 = vmul.f32 %v462, %v462
      %v487 = vmul.f32 %v463, %v463
      %v488 = vmul.f32 %v464, %v464
      %v489 = vmul.f32 %v465, %v465
      %v490 = vsub.f32 %v482, %v486
      %v491 = vsub.f32 %v483, %v487
      %v492 = vsub.f32 %v484, %v488
      %v493 = vsub.f32 %v485, %v489
      %v494 = vadd.f32 %v490, 1e-05
      %v495 = vadd.f32 %v491, 1e-05
      %v496 = vadd.f32 %v492, 1e-05
      %v497 = vadd.f32 %v493, 1e-05
      %v498 = vrsqrt.pop %v494
      %v499 = vrsqrt.pop %v495
      %v500 = vrsqrt.pop %v496
      %v501 = vrsqrt.pop %v497
      %v502 = vsub.f32 %v444, %v462
      %v503 = vsub.f32 %v445, %v463
      %v504 = vsub.f32 %v446, %v464
      %v505 = vsub.f32 %v447, %v465
      %v506 = vmul.f32 %v502, %v498
      %v507 = vmul.f32 %v503, %v499
      %v508 = vmul.f32 %v504, %v500
      %v509 = vmul.f32 %v505, %v501
      %v510 = vld [vmem:[%s1] sm:$0x1]
      %v512 = vlaneseq
      %v513 = vshrl.u32 %v512, 7
      %v514 = vsub.s32 0, %v513
      %v515 = vrot.slane %v510, %v514
      %v517 = vmul.f32 %v506, %v515
      %v518 = vmul.f32 %v507, %v515
      %v519 = vmul.f32 %v508, %v515
      %v520 = vmul.f32 %v509, %v515
      %v521 = vld [vmem:[%s2] sm:$0x1]
      %v523 = vlaneseq
      %v524 = vshrl.u32 %v523, 7
      %v525 = vsub.s32 0, %v524
      %v526 = vrot.slane %v521, %v525
      %v528 = vadd.f32 %v517, %v526
      %v529 = vadd.f32 %v518, %v526
      %v530 = vadd.f32 %v519, %v526
      %v531 = vadd.f32 %v520, %v526
      %vm536 = vcmask 1043456
      %v537 = vrot.slane %v528, 4
      %v538 = vrot.slane %v529, 4
      %v539 = vsel %vm536, %v537, %v538
      %v540 = vrot.slane %v530, 4
      %v541 = vsel %vm536, %v538, %v540
      %v542 = vrot.slane %v531, 4
      %v543 = vsel %vm536, %v540, %v542
      %v548 = vsel %vm536, 0.0, %v537
      %v550 = vsel %vm536, %v542, 0.0
      %551 = vrot.lane.b32.xlu0 %v528, 32
      %v552 = vpop.permute.xlu0 %551
      %553 = vrot.lane.b32.xlu0 %v529, 32
      %v554 = vpop.permute.xlu0 %553
      %555 = vrot.lane.b32.xlu0 %v530, 32
      %v556 = vpop.permute.xlu0 %555
      %557 = vrot.lane.b32.xlu0 %v531, 32
      %v558 = vpop.permute.xlu0 %557
      %564 = vrot.lane.b32.xlu0 %v539, 64
      %v565 = vpop.permute.xlu0 %564
      %566 = vrot.lane.b32.xlu0 %v541, 64
      %v567 = vpop.permute.xlu0 %566
      %568 = vrot.lane.b32.xlu0 %v543, 64
      %v569 = vpop.permute.xlu0 %568
      %570 = vrot.lane.b32.xlu0 %v550, 64
      %v571 = vpop.permute.xlu0 %570
      %v576 = vsel %vm448, %v548, %v552
      %v577 = vsel %vm448, %v539, %v554
      %v578 = vsel %vm448, %v541, %v556
      %v579 = vsel %vm448, %v543, %v558
      %vm580 = vcmask 523264
      %v581 = vsel %vm580, %v576, %v565
      %v582 = vsel %vm580, %v577, %v567
      %v583 = vsel %vm580, %v578, %v569
      %v584 = vsel %vm580, %v579, %v571
      %v585 = vld [vmem:[%s3] sm:$0xff]
      %v586 = vld [vmem:[%s3 + $0x8] sm:$0xff]
      %v587 = vld [vmem:[%s3 + $0x10] sm:$0xff]
      %v588 = vld [vmem:[%s3 + $0x18] sm:$0xff]
      %v589 = vld [vmem:[%s3 + $0x20] sm:$0xff]
      %v590 = vld [vmem:[%s3 + $0x28] sm:$0xff]
      %v591 = vld [vmem:[%s3 + $0x30] sm:$0xff]
      %v592 = vld [vmem:[%s3 + $0x38] sm:$0xff]
      %v593 = vld [vmem:[%s3 + $0x40] sm:$0xff]
      %v594 = vld [vmem:[%s3 + $0x48] sm:$0xff]
      %v595 = vld [vmem:[%s3 + $0x50] sm:$0xff]
      %v596 = vld [vmem:[%s3 + $0x58] sm:$0xff]
      %v597 = vld [vmem:[%s4] sm:$0x1]
      %v599 = vlaneseq
      %v600 = vshrl.u32 %v599, 7
      %v601 = vsub.s32 0, %v600
      %v602 = vrot.slane %v597, %v601
      %vm604 = vcmask 785408
      %v606 = vsel %vm604, %v581, 0
      %v609 = vsel %vm604, %v582, 0
      %v612 = vsel %vm604, %v583, 0
      %v615 = vsel %vm604, %v584, 0
      %617 = vmatprep.subr.mxu0 0.0
      %618 = vmatpush1.msra.mxu0 0.0
      %619 = vmatprep.subr.mxu0 0.0
      %620 = vmatpush1.msra.mxu0 0.0
      %621 = vmatprep.subr.mxu0 0.0
      %622 = vmatpush1.msra.mxu0 0.0
      %623 = vmatprep.subr.mxu0 0.0
      %624 = vmatpush1.msra.mxu0 0.0
      %625 = vmatprep.subr.mxu0 0.0
      %626 = vmatpush1.msra.mxu0 %v596
      %627 = vmatprep.subr.mxu0 0.0
      %628 = vmatpush1.msra.mxu0 %v595
      %629 = vmatprep.subr.mxu0 0.0
      %630 = vmatpush1.msra.mxu0 %v594
      %631 = vmatprep.subr.mxu0 0.0
      %632 = vmatpush1.msra.mxu0 %v593
      %633 = vmatprep.subr.mxu0 0.0
      %634 = vmatpush1.msra.mxu0 %v592
      %635 = vmatprep.subr.mxu0 0.0
      %636 = vmatpush1.msra.mxu0 %v591
      %637 = vmatprep.subr.mxu0 0.0
      %638 = vmatpush1.msra.mxu0 %v590
      %639 = vmatprep.subr.mxu0 0.0
      %640 = vmatpush1.msra.mxu0 %v589
      %641 = vmatprep.subr.mxu0 0.0
      %642 = vmatpush1.msra.mxu0 %v588
      %643 = vmatprep.subr.mxu0 0.0
      %644 = vmatpush1.msra.mxu0 %v587
      %645 = vmatprep.subr.mxu0 0.0
      %646 = vmatpush1.msra.mxu0 %v586
      %647 = vmatprep.subr.mxu0 0.0
      %648 = vmatpush1.msra.mxu0 %v585
      %649 = vmatprep.subr.mxu0 0.0
      %650 = vmatpush2.msra.mxu0 0.0
      %651 = vmatprep.subr.mxu0 0.0
      %652 = vmatpush2.msra.mxu0 0.0
      %653 = vmatprep.subr.mxu0 0.0
      %654 = vmatpush2.msra.mxu0 0.0
      %655 = vmatprep.subr.mxu0 0.0
      %656 = vmatpush2.msra.mxu0 0.0
      %657 = vmatprep.subr.mxu0 0.0
      %658 = vmatpush2.msra.mxu0 0.0
      %659 = vmatprep.subr.mxu0 0.0
      %660 = vmatpush2.msra.mxu0 0.0
      %661 = vmatprep.subr.mxu0 0.0
      %662 = vmatpush2.msra.mxu0 0.0
      %663 = vmatprep.subr.mxu0 0.0
      %664 = vmatpush2.msra.mxu0 0.0
      %665 = vmatprep.subr.mxu0 0.0
      %666 = vmatpush2.msra.mxu0 0.0
      %667 = vmatprep.subr.mxu0 0.0
      %668 = vmatpush2.msra.mxu0 0.0
      %669 = vmatprep.subr.mxu0 0.0
      %670 = vmatpush2.msra.mxu0 0.0
      %671 = vmatprep.subr.mxu0 0.0
      %672 = vmatpush2.msra.mxu0 0.0
      %673 = vmatprep.subr.mxu0 0.0
      %674 = vmatpush2.msra.mxu0 0.0
      %675 = vmatprep.subr.mxu0 0.0
      %676 = vmatpush2.msra.mxu0 0.0
      %677 = vmatprep.subr.mxu0 0.0
      %678 = vmatpush2.msra.mxu0 0.0
      %679 = vmatprep.subr.mxu0 0.0
      %680 = vmatpush2.msra.mxu0 0.0
      %681 = vmatprep.mubr.f32.mxu0 0.0
      %682 = vmatmul.mubr.f32.gmra.mxu0 %v606
      %v683 = vpop.f32.mrf.mxu0
      %v684 = vadd.f32 %v602, %v683
      %v685 = vpop.f32.mrf.mxu0
      %686 = vmatprep.mubr.f32.mxu0 0.0
      %687 = vmatmul.mubr.f32.gmra.mxu0 %v609
      %v688 = vpop.f32.mrf.mxu0
      %v689 = vadd.f32 %v602, %v688
      %v690 = vpop.f32.mrf.mxu0
      %691 = vmatprep.mubr.f32.mxu0 0.0
      %692 = vmatmul.mubr.f32.gmra.mxu0 %v612
      %v693 = vpop.f32.mrf.mxu0
      %v694 = vadd.f32 %v602, %v693
      %v695 = vpop.f32.mrf.mxu0
      %696 = vmatprep.mubr.f32.mxu0 0.0
      %697 = vmatmul.mubr.f32.gmra.mxu0 %v615
      %v698 = vpop.f32.mrf.mxu0
      %v699 = vadd.f32 %v602, %v698
      %v700 = vpop.f32.mrf.mxu0
      %701 = vdwg.mxu0
      %v702 = vmax.f32 %v684, 0.0
      %v703 = vmax.f32 %v689, 0.0
      %v704 = vmax.f32 %v694, 0.0
      %v705 = vmax.f32 %v699, 0.0
      %v706 = vsel %vm448, %v702, 0.0
      %707 = vadd.xlane.f32.xlu0 %v706
      %v708 = vpop.xlane.xlu0 %707
      %v709 = vsel %vm448, %v703, 0.0
      %710 = vadd.xlane.f32.xlu0 %v709
      %v711 = vpop.xlane.xlu0 %710
      %v712 = vsel %vm448, %v704, 0.0
      %713 = vadd.xlane.f32.xlu0 %v712
      %v714 = vpop.xlane.xlu0 %713
      %v715 = vsel %vm448, %v705, 0.0
      %716 = vadd.xlane.f32.xlu0 %v715
      %v717 = vpop.xlane.xlu0 %716
      %v718 = vmul.f32 %v708, %v461
      %v719 = vmul.f32 %v711, %v461
      %v720 = vmul.f32 %v714, %v461
      %v721 = vmul.f32 %v717, %v461
      %v722 = vmul.f32 %v702, %v702
      %v723 = vmul.f32 %v703, %v703
      %v724 = vmul.f32 %v704, %v704
      %v725 = vmul.f32 %v705, %v705
      %v726 = vsel %vm448, %v722, 0.0
      %727 = vadd.xlane.f32.xlu0 %v726
      %v728 = vpop.xlane.xlu0 %727
      %v729 = vsel %vm448, %v723, 0.0
      %730 = vadd.xlane.f32.xlu0 %v729
      %v731 = vpop.xlane.xlu0 %730
      %v732 = vsel %vm448, %v724, 0.0
      %733 = vadd.xlane.f32.xlu0 %v732
      %v734 = vpop.xlane.xlu0 %733
      %v735 = vsel %vm448, %v725, 0.0
      %736 = vadd.xlane.f32.xlu0 %v735
      %v737 = vpop.xlane.xlu0 %736
      %v738 = vmul.f32 %v728, %v461
      %v739 = vmul.f32 %v731, %v461
      %v740 = vmul.f32 %v734, %v461
      %v741 = vmul.f32 %v737, %v461
      %v742 = vmul.f32 %v718, %v718
      %v743 = vmul.f32 %v719, %v719
      %v744 = vmul.f32 %v720, %v720
      %v745 = vmul.f32 %v721, %v721
      %v746 = vsub.f32 %v738, %v742
      %v747 = vsub.f32 %v739, %v743
      %v748 = vsub.f32 %v740, %v744
      %v749 = vsub.f32 %v741, %v745
      %v750 = vadd.f32 %v746, 1e-05
      %v751 = vadd.f32 %v747, 1e-05
      %v752 = vadd.f32 %v748, 1e-05
      %v753 = vadd.f32 %v749, 1e-05
      %v754 = vrsqrt.pop %v750
      %v755 = vrsqrt.pop %v751
      %v756 = vrsqrt.pop %v752
      %v757 = vrsqrt.pop %v753
      %v758 = vsub.f32 %v702, %v718
      %v759 = vsub.f32 %v703, %v719
      %v760 = vsub.f32 %v704, %v720
      %v761 = vsub.f32 %v705, %v721
      %v762 = vmul.f32 %v758, %v754
      %v763 = vmul.f32 %v759, %v755
      %v764 = vmul.f32 %v760, %v756
      %v765 = vmul.f32 %v761, %v757
      %v766 = vld [vmem:[%s5] sm:$0x1]
      %v768 = vlaneseq
      %v769 = vshrl.u32 %v768, 7
      %v770 = vsub.s32 0, %v769
      %v771 = vrot.slane %v766, %v770
      %v773 = vmul.f32 %v762, %v771
      %v774 = vmul.f32 %v763, %v771
      %v775 = vmul.f32 %v764, %v771
      %v776 = vmul.f32 %v765, %v771
      %v777 = vld [vmem:[%s6] sm:$0x1]
      %v779 = vlaneseq
      %v780 = vshrl.u32 %v779, 7
      %v781 = vsub.s32 0, %v780
      %v782 = vrot.slane %v777, %v781
      %v784 = vadd.f32 %v773, %v782
      %v785 = vadd.f32 %v774, %v782
      %v786 = vadd.f32 %v775, %v782
      %v787 = vadd.f32 %v776, %v782
      %v792 = vrot.slane %v784, 4
      %v793 = vrot.slane %v785, 4
      %v794 = vsel %vm536, %v792, %v793
      %v795 = vrot.slane %v786, 4
      %v796 = vsel %vm536, %v793, %v795
      %v797 = vrot.slane %v787, 4
      %v798 = vsel %vm536, %v795, %v797
      %v803 = vsel %vm536, 0.0, %v792
      %v805 = vsel %vm536, %v797, 0.0
      %806 = vrot.lane.b32.xlu0 %v784, 32
      %v807 = vpop.permute.xlu0 %806
      %808 = vrot.lane.b32.xlu0 %v785, 32
      %v809 = vpop.permute.xlu0 %808
      %810 = vrot.lane.b32.xlu0 %v786, 32
      %v811 = vpop.permute.xlu0 %810
      %812 = vrot.lane.b32.xlu0 %v787, 32
      %v813 = vpop.permute.xlu0 %812
      %819 = vrot.lane.b32.xlu0 %v794, 64
      %v820 = vpop.permute.xlu0 %819
      %821 = vrot.lane.b32.xlu0 %v796, 64
      %v822 = vpop.permute.xlu0 %821
      %823 = vrot.lane.b32.xlu0 %v798, 64
      %v824 = vpop.permute.xlu0 %823
      %825 = vrot.lane.b32.xlu0 %v805, 64
      %v826 = vpop.permute.xlu0 %825
      %v831 = vsel %vm448, %v803, %v807
      %v832 = vsel %vm448, %v794, %v809
      %v833 = vsel %vm448, %v796, %v811
      %v834 = vsel %vm448, %v798, %v813
      %v835 = vsel %vm580, %v831, %v820
      %v836 = vsel %vm580, %v832, %v822
      %v837 = vsel %vm580, %v833, %v824
      %v838 = vsel %vm580, %v834, %v826
      %v839 = vld [vmem:[%s7] sm:$0xff]
      %v840 = vld [vmem:[%s7 + $0x8] sm:$0xff]
      %v841 = vld [vmem:[%s7 + $0x10] sm:$0xff]
      %v842 = vld [vmem:[%s7 + $0x18] sm:$0xff]
      %v843 = vld [vmem:[%s7 + $0x20] sm:$0xff]
      %v844 = vld [vmem:[%s7 + $0x28] sm:$0xff]
      %v845 = vld [vmem:[%s7 + $0x30] sm:$0xff]
      %v846 = vld [vmem:[%s7 + $0x38] sm:$0xff]
      %v847 = vld [vmem:[%s7 + $0x40] sm:$0xff]
      %v848 = vld [vmem:[%s7 + $0x48] sm:$0xff]
      %v849 = vld [vmem:[%s7 + $0x50] sm:$0xff]
      %v850 = vld [vmem:[%s7 + $0x58] sm:$0xff]
      %v851 = vld [vmem:[%s8] sm:$0x1]
      %v853 = vlaneseq
      %v854 = vshrl.u32 %v853, 7
      %v855 = vsub.s32 0, %v854
      %v856 = vrot.slane %v851, %v855
      %v859 = vsel %vm604, %v835, 0
      %v862 = vsel %vm604, %v836, 0
      %v865 = vsel %vm604, %v837, 0
      %v868 = vsel %vm604, %v838, 0
      %870 = vmatprep.subr.mxu0 0.0
      %871 = vmatpush1.msra.mxu0 0.0
      %872 = vmatprep.subr.mxu0 0.0
      %873 = vmatpush1.msra.mxu0 0.0
      %874 = vmatprep.subr.mxu0 0.0
      %875 = vmatpush1.msra.mxu0 0.0
      %876 = vmatprep.subr.mxu0 0.0
      %877 = vmatpush1.msra.mxu0 0.0
      %878 = vmatprep.subr.mxu0 0.0
      %879 = vmatpush1.msra.mxu0 %v850
      %880 = vmatprep.subr.mxu0 0.0
      %881 = vmatpush1.msra.mxu0 %v849
      %882 = vmatprep.subr.mxu0 0.0
      %883 = vmatpush1.msra.mxu0 %v848
      %884 = vmatprep.subr.mxu0 0.0
      %885 = vmatpush1.msra.mxu0 %v847
      %886 = vmatprep.subr.mxu0 0.0
      %887 = vmatpush1.msra.mxu0 %v846
      %888 = vmatprep.subr.mxu0 0.0
      %889 = vmatpush1.msra.mxu0 %v845
      %890 = vmatprep.subr.mxu0 0.0
      %891 = vmatpush1.msra.mxu0 %v844
      %892 = vmatprep.subr.mxu0 0.0
      %893 = vmatpush1.msra.mxu0 %v843
      %894 = vmatprep.subr.mxu0 0.0
      %895 = vmatpush1.msra.mxu0 %v842
      %896 = vmatprep.subr.mxu0 0.0
      %897 = vmatpush1.msra.mxu0 %v841
      %898 = vmatprep.subr.mxu0 0.0
      %899 = vmatpush1.msra.mxu0 %v840
      %900 = vmatprep.subr.mxu0 0.0
      %901 = vmatpush1.msra.mxu0 %v839
      %902 = vmatprep.subr.mxu0 0.0
      %903 = vmatpush2.msra.mxu0 0.0
      %904 = vmatprep.subr.mxu0 0.0
      %905 = vmatpush2.msra.mxu0 0.0
      %906 = vmatprep.subr.mxu0 0.0
      %907 = vmatpush2.msra.mxu0 0.0
      %908 = vmatprep.subr.mxu0 0.0
      %909 = vmatpush2.msra.mxu0 0.0
      %910 = vmatprep.subr.mxu0 0.0
      %911 = vmatpush2.msra.mxu0 0.0
      %912 = vmatprep.subr.mxu0 0.0
      %913 = vmatpush2.msra.mxu0 0.0
      %914 = vmatprep.subr.mxu0 0.0
      %915 = vmatpush2.msra.mxu0 0.0
      %916 = vmatprep.subr.mxu0 0.0
      %917 = vmatpush2.msra.mxu0 0.0
      %918 = vmatprep.subr.mxu0 0.0
      %919 = vmatpush2.msra.mxu0 0.0
      %920 = vmatprep.subr.mxu0 0.0
      %921 = vmatpush2.msra.mxu0 0.0
      %922 = vmatprep.subr.mxu0 0.0
      %923 = vmatpush2.msra.mxu0 0.0
      %924 = vmatprep.subr.mxu0 0.0
      %925 = vmatpush2.msra.mxu0 0.0
      %926 = vmatprep.subr.mxu0 0.0
      %927 = vmatpush2.msra.mxu0 0.0
      %928 = vmatprep.subr.mxu0 0.0
      %929 = vmatpush2.msra.mxu0 0.0
      %930 = vmatprep.subr.mxu0 0.0
      %931 = vmatpush2.msra.mxu0 0.0
      %932 = vmatprep.subr.mxu0 0.0
      %933 = vmatpush2.msra.mxu0 0.0
      %934 = vmatprep.mubr.f32.mxu0 0.0
      %935 = vmatmul.mubr.f32.gmra.mxu0 %v859
      %v936 = vpop.f32.mrf.mxu0
      %v937 = vadd.f32 %v856, %v936
      %v938 = vpop.f32.mrf.mxu0
      %939 = vmatprep.mubr.f32.mxu0 0.0
      %940 = vmatmul.mubr.f32.gmra.mxu0 %v862
      %v941 = vpop.f32.mrf.mxu0
      %v942 = vadd.f32 %v856, %v941
      %v943 = vpop.f32.mrf.mxu0
      %944 = vmatprep.mubr.f32.mxu0 0.0
      %945 = vmatmul.mubr.f32.gmra.mxu0 %v865
      %v946 = vpop.f32.mrf.mxu0
      %v947 = vadd.f32 %v856, %v946
      %v948 = vpop.f32.mrf.mxu0
      %949 = vmatprep.mubr.f32.mxu0 0.0
      %950 = vmatmul.mubr.f32.gmra.mxu0 %v868
      %v951 = vpop.f32.mrf.mxu0
      %v952 = vadd.f32 %v856, %v951
      %v953 = vpop.f32.mrf.mxu0
      %954 = vdwg.mxu0
      %v955 = vmax.f32 %v937, 0.0
      %v956 = vmax.f32 %v942, 0.0
      %v957 = vmax.f32 %v947, 0.0
      %v958 = vmax.f32 %v952, 0.0
      %v959 = vsel %vm448, %v955, 0.0
      %960 = vadd.xlane.f32.xlu0 %v959
      %v961 = vpop.xlane.xlu0 %960
      %v962 = vsel %vm448, %v956, 0.0
      %963 = vadd.xlane.f32.xlu0 %v962
      %v964 = vpop.xlane.xlu0 %963
      %v965 = vsel %vm448, %v957, 0.0
      %966 = vadd.xlane.f32.xlu0 %v965
      %v967 = vpop.xlane.xlu0 %966
      %v968 = vsel %vm448, %v958, 0.0
      %969 = vadd.xlane.f32.xlu0 %v968
      %v970 = vpop.xlane.xlu0 %969
      %v971 = vmul.f32 %v961, %v461
      %v972 = vmul.f32 %v964, %v461
      %v973 = vmul.f32 %v967, %v461
      %v974 = vmul.f32 %v970, %v461
      %v975 = vmul.f32 %v955, %v955
      %v976 = vmul.f32 %v956, %v956
      %v977 = vmul.f32 %v957, %v957
      %v978 = vmul.f32 %v958, %v958
      %v979 = vsel %vm448, %v975, 0.0
      %980 = vadd.xlane.f32.xlu0 %v979
      %v981 = vpop.xlane.xlu0 %980
      %v982 = vsel %vm448, %v976, 0.0
      %983 = vadd.xlane.f32.xlu0 %v982
      %v984 = vpop.xlane.xlu0 %983
      %v985 = vsel %vm448, %v977, 0.0
      %986 = vadd.xlane.f32.xlu0 %v985
      %v987 = vpop.xlane.xlu0 %986
      %v988 = vsel %vm448, %v978, 0.0
      %989 = vadd.xlane.f32.xlu0 %v988
      %v990 = vpop.xlane.xlu0 %989
      %v991 = vmul.f32 %v981, %v461
      %v992 = vmul.f32 %v984, %v461
      %v993 = vmul.f32 %v987, %v461
      %v994 = vmul.f32 %v990, %v461
      %v995 = vmul.f32 %v971, %v971
      %v996 = vmul.f32 %v972, %v972
      %v997 = vmul.f32 %v973, %v973
      %v998 = vmul.f32 %v974, %v974
      %v999 = vsub.f32 %v991, %v995
      %v1000 = vsub.f32 %v992, %v996
      %v1001 = vsub.f32 %v993, %v997
      %v1002 = vsub.f32 %v994, %v998
      %v1003 = vadd.f32 %v999, 1e-05
      %v1004 = vadd.f32 %v1000, 1e-05
      %v1005 = vadd.f32 %v1001, 1e-05
      %v1006 = vadd.f32 %v1002, 1e-05
      %v1007 = vrsqrt.pop %v1003
      %v1008 = vrsqrt.pop %v1004
      %v1009 = vrsqrt.pop %v1005
      %v1010 = vrsqrt.pop %v1006
      %v1011 = vsub.f32 %v955, %v971
      %v1012 = vsub.f32 %v956, %v972
      %v1013 = vsub.f32 %v957, %v973
      %v1014 = vsub.f32 %v958, %v974
      %v1015 = vmul.f32 %v1011, %v1007
      %v1016 = vmul.f32 %v1012, %v1008
      %v1017 = vmul.f32 %v1013, %v1009
      %v1018 = vmul.f32 %v1014, %v1010
      %v1019 = vld [vmem:[%s9] sm:$0x1]
      %v1021 = vlaneseq
      %v1022 = vshrl.u32 %v1021, 7
      %v1023 = vsub.s32 0, %v1022
      %v1024 = vrot.slane %v1019, %v1023
      %v1026 = vmul.f32 %v1015, %v1024
      %v1027 = vmul.f32 %v1016, %v1024
      %v1028 = vmul.f32 %v1017, %v1024
      %v1029 = vmul.f32 %v1018, %v1024
      %v1030 = vld [vmem:[%s10] sm:$0x1]
      %v1032 = vlaneseq
      %v1033 = vshrl.u32 %v1032, 7
      %v1034 = vsub.s32 0, %v1033
      %v1035 = vrot.slane %v1030, %v1034
      %v1037 = vadd.f32 %v1026, %v1035
      %v1038 = vadd.f32 %v1027, %v1035
      %v1039 = vadd.f32 %v1028, %v1035
      %v1040 = vadd.f32 %v1029, %v1035
      %v1045 = vrot.slane %v1037, 4
      %v1046 = vrot.slane %v1038, 4
      %v1047 = vsel %vm536, %v1045, %v1046
      %v1048 = vrot.slane %v1039, 4
      %v1049 = vsel %vm536, %v1046, %v1048
      %v1050 = vrot.slane %v1040, 4
      %v1051 = vsel %vm536, %v1048, %v1050
      %v1056 = vsel %vm536, 0.0, %v1045
      %v1058 = vsel %vm536, %v1050, 0.0
      %1059 = vrot.lane.b32.xlu0 %v1037, 32
      %v1060 = vpop.permute.xlu0 %1059
      %1061 = vrot.lane.b32.xlu0 %v1038, 32
      %v1062 = vpop.permute.xlu0 %1061
      %1063 = vrot.lane.b32.xlu0 %v1039, 32
      %v1064 = vpop.permute.xlu0 %1063
      %1065 = vrot.lane.b32.xlu0 %v1040, 32
      %v1066 = vpop.permute.xlu0 %1065
      %1072 = vrot.lane.b32.xlu0 %v1047, 64
      %v1073 = vpop.permute.xlu0 %1072
      %1074 = vrot.lane.b32.xlu0 %v1049, 64
      %v1075 = vpop.permute.xlu0 %1074
      %1076 = vrot.lane.b32.xlu0 %v1051, 64
      %v1077 = vpop.permute.xlu0 %1076
      %1078 = vrot.lane.b32.xlu0 %v1058, 64
      %v1079 = vpop.permute.xlu0 %1078
      %v1084 = vsel %vm448, %v1056, %v1060
      %v1085 = vsel %vm448, %v1047, %v1062
      %v1086 = vsel %vm448, %v1049, %v1064
      %v1087 = vsel %vm448, %v1051, %v1066
      %v1088 = vsel %vm580, %v1084, %v1073
      %v1089 = vsel %vm580, %v1085, %v1075
      %v1090 = vsel %vm580, %v1086, %v1077
      %v1091 = vsel %vm580, %v1087, %v1079
      %v1092 = vld [vmem:[%s11] sm:$0xff]
      %v1093 = vld [vmem:[%s11 + $0x8] sm:$0xff]
      %v1094 = vld [vmem:[%s11 + $0x10] sm:$0xff]
      %v1095 = vld [vmem:[%s11 + $0x18] sm:$0xff]
      %v1096 = vld [vmem:[%s11 + $0x20] sm:$0xff]
      %v1097 = vld [vmem:[%s11 + $0x28] sm:$0xff]
      %v1098 = vld [vmem:[%s11 + $0x30] sm:$0xff]
      %v1099 = vld [vmem:[%s11 + $0x38] sm:$0xff]
      %v1100 = vld [vmem:[%s11 + $0x40] sm:$0xff]
      %v1101 = vld [vmem:[%s11 + $0x48] sm:$0xff]
      %v1102 = vld [vmem:[%s11 + $0x50] sm:$0xff]
      %v1103 = vld [vmem:[%s11 + $0x58] sm:$0xff]
      %v1104 = vld [vmem:[%s12] sm:$0x1]
      %v1106 = vlaneseq
      %v1107 = vshrl.u32 %v1106, 7
      %v1108 = vsub.s32 0, %v1107
      %v1109 = vrot.slane %v1104, %v1108
      %v1112 = vsel %vm604, %v1088, 0
      %v1115 = vsel %vm604, %v1089, 0
      %v1118 = vsel %vm604, %v1090, 0
      %v1121 = vsel %vm604, %v1091, 0
      %1123 = vmatprep.subr.mxu0 0.0
      %1124 = vmatpush1.msra.mxu0 0.0
      %1125 = vmatprep.subr.mxu0 0.0
      %1126 = vmatpush1.msra.mxu0 0.0
      %1127 = vmatprep.subr.mxu0 0.0
      %1128 = vmatpush1.msra.mxu0 0.0
      %1129 = vmatprep.subr.mxu0 0.0
      %1130 = vmatpush1.msra.mxu0 0.0
      %1131 = vmatprep.subr.mxu0 0.0
      %1132 = vmatpush1.msra.mxu0 %v1103
      %1133 = vmatprep.subr.mxu0 0.0
      %1134 = vmatpush1.msra.mxu0 %v1102
      %1135 = vmatprep.subr.mxu0 0.0
      %1136 = vmatpush1.msra.mxu0 %v1101
      %1137 = vmatprep.subr.mxu0 0.0
      %1138 = vmatpush1.msra.mxu0 %v1100
      %1139 = vmatprep.subr.mxu0 0.0
      %1140 = vmatpush1.msra.mxu0 %v1099
      %1141 = vmatprep.subr.mxu0 0.0
      %1142 = vmatpush1.msra.mxu0 %v1098
      %1143 = vmatprep.subr.mxu0 0.0
      %1144 = vmatpush1.msra.mxu0 %v1097
      %1145 = vmatprep.subr.mxu0 0.0
      %1146 = vmatpush1.msra.mxu0 %v1096
      %1147 = vmatprep.subr.mxu0 0.0
      %1148 = vmatpush1.msra.mxu0 %v1095
      %1149 = vmatprep.subr.mxu0 0.0
      %1150 = vmatpush1.msra.mxu0 %v1094
      %1151 = vmatprep.subr.mxu0 0.0
      %1152 = vmatpush1.msra.mxu0 %v1093
      %1153 = vmatprep.subr.mxu0 0.0
      %1154 = vmatpush1.msra.mxu0 %v1092
      %1155 = vmatprep.subr.mxu0 0.0
      %1156 = vmatpush2.msra.mxu0 0.0
      %1157 = vmatprep.subr.mxu0 0.0
      %1158 = vmatpush2.msra.mxu0 0.0
      %1159 = vmatprep.subr.mxu0 0.0
      %1160 = vmatpush2.msra.mxu0 0.0
      %1161 = vmatprep.subr.mxu0 0.0
      %1162 = vmatpush2.msra.mxu0 0.0
      %1163 = vmatprep.subr.mxu0 0.0
      %1164 = vmatpush2.msra.mxu0 0.0
      %1165 = vmatprep.subr.mxu0 0.0
      %1166 = vmatpush2.msra.mxu0 0.0
      %1167 = vmatprep.subr.mxu0 0.0
      %1168 = vmatpush2.msra.mxu0 0.0
      %1169 = vmatprep.subr.mxu0 0.0
      %1170 = vmatpush2.msra.mxu0 0.0
      %1171 = vmatprep.subr.mxu0 0.0
      %1172 = vmatpush2.msra.mxu0 0.0
      %1173 = vmatprep.subr.mxu0 0.0
      %1174 = vmatpush2.msra.mxu0 0.0
      %1175 = vmatprep.subr.mxu0 0.0
      %1176 = vmatpush2.msra.mxu0 0.0
      %1177 = vmatprep.subr.mxu0 0.0
      %1178 = vmatpush2.msra.mxu0 0.0
      %1179 = vmatprep.subr.mxu0 0.0
      %1180 = vmatpush2.msra.mxu0 0.0
      %1181 = vmatprep.subr.mxu0 0.0
      %1182 = vmatpush2.msra.mxu0 0.0
      %1183 = vmatprep.subr.mxu0 0.0
      %1184 = vmatpush2.msra.mxu0 0.0
      %1185 = vmatprep.subr.mxu0 0.0
      %1186 = vmatpush2.msra.mxu0 0.0
      %1187 = vmatprep.mubr.f32.mxu0 0.0
      %1188 = vmatmul.mubr.f32.gmra.mxu0 %v1112
      %v1189 = vpop.f32.mrf.mxu0
      %v1190 = vadd.f32 %v1109, %v1189
      %v1191 = vpop.f32.mrf.mxu0
      %1192 = vmatprep.mubr.f32.mxu0 0.0
      %1193 = vmatmul.mubr.f32.gmra.mxu0 %v1115
      %v1194 = vpop.f32.mrf.mxu0
      %v1195 = vadd.f32 %v1109, %v1194
      %v1196 = vpop.f32.mrf.mxu0
      %1197 = vmatprep.mubr.f32.mxu0 0.0
      %1198 = vmatmul.mubr.f32.gmra.mxu0 %v1118
      %v1199 = vpop.f32.mrf.mxu0
      %v1200 = vadd.f32 %v1109, %v1199
      %v1201 = vpop.f32.mrf.mxu0
      %1202 = vmatprep.mubr.f32.mxu0 0.0
      %1203 = vmatmul.mubr.f32.gmra.mxu0 %v1121
      %v1204 = vpop.f32.mrf.mxu0
      %v1205 = vadd.f32 %v1109, %v1204
      %v1206 = vpop.f32.mrf.mxu0
      %1207 = vdwg.mxu0
      %1208 = vst.msk [vmem:[%s442] sm:$0xff] %vm448, %v1190
      %1209 = vst.msk [vmem:[%s442 + $0x8] sm:$0xff] %vm448, %v1195
      %1210 = vst.msk [vmem:[%s442 + $0x10] sm:$0xff] %vm448, %v1200
      %1211 = vst.msk [vmem:[%s442 + $0x18] sm:$0xff] %vm448, %v1205
      %s1212 = smul.u32 4, %s24
      %p1213 = scmp.lt.s32.totalorder %s1212, 7
      %s1214 = scalar_select %p1213, %s1212, 7
      %s1215 = smul.addr %s1214, 8
      %s1216 = scalar_lea.vmem %s13, %s1215
      // Predicated region
      $region73: #{tpu_custom_call.1} parent=71 // pred_check
        %p1217 = pneg %p320
      $region74: #{tpu_custom_call.1} parent=71 // pred_check_branch
        %1219 = sbr.rel (%p1217) target = $region76
      $region75: #{tpu_custom_call.1} parent=71 // pred_region
        %s1220 = smul.u32 4, %s24
      $region76: #{tpu_custom_call.1} parent=71 // pred_fallthru
        _
    $region72: #{tpu_custom_call.1} parent=5 // pred_fallthru
      _
    %p1221 = scmp.le.s32.totalorder 2, %s19
    // Predicated region
    $region77: #{tpu_custom_call.1} parent=5 // pred_check
      %p1222 = pneg %p1221
    $region78: #{tpu_custom_call.1} parent=5 // pred_check_branch
      %1224 = sbr.rel (%p1222) target = $region80
    $region79: #{tpu_custom_call.1} parent=5 // pred_region
      %s1225 = ssub.s32 %s19, 2
      // Predicated region
      $region81: #{tpu_custom_call.1} parent=79 // pred_check
        %p1226 = pneg %p326
      $region82: #{tpu_custom_call.1} parent=79 // pred_check_branch
        %1228 = sbr.rel (%p1226) target = $region84
      $region83: #{tpu_custom_call.1} parent=79 // pred_region
        %s1229 = smul.u32 4, %s25
        %p1230 = scmp.lt.s32.totalorder %s1229, 7
        %s1231 = scalar_select %p1230, %s1229, 7
        %s1232 = smul.addr %s1231, 8
        %s1233 = scalar_lea.vmem %s13, %s1232
      $region84: #{tpu_custom_call.1} parent=79 // pred_fallthru
        _
    $region80: #{tpu_custom_call.1} parent=5 // pred_fallthru
      _
  $region6: #{tpu_custom_call.1} parent=0 // loop_footer
    %s23 = sadd.s32 1, %s19
  $region7: #{tpu_custom_call.1} parent=0 // loop_footer_branch
    %18 = sbr.rel target = $region3
  $region8: #{tpu_custom_call.1} parent=0 // loop_exit
    _

// kernel: tpu_custom_call.1
$region0: #{tpu_custom_call.1}
  #allocation0 [shape = 'u32[]', space=smem, size = 0x4, offset = 0x4, fixed_abs, tag = 'smem constant byte address 0x4 - core index']
  #allocation1 [shape = 'u32[144,128]{1,0:T(1,128)}', space=vmem, size = 0x12000, scoped, tag = 'internal scratch']
  %s0 = inlined_call_operand.vmem [shape: f32[64,32], index: 0, kind: input, shape index: {}]
  %s1 = inlined_call_operand.vmem [shape: f32[1,32], index: 1, kind: input, shape index: {}]
  %s2 = inlined_call_operand.vmem [shape: f32[1,32], index: 2, kind: input, shape index: {}]
  %s3 = inlined_call_operand.vmem [shape: f32[96,32], index: 3, kind: input, shape index: {}]
  %s4 = inlined_call_operand.vmem [shape: f32[1,32], index: 4, kind: input, shape index: {}]
  %s5 = inlined_call_operand.vmem [shape: f32[1,32], index: 5, kind: input, shape index: {}]
  %s6 = inlined_call_operand.vmem [shape: f32[1,32], index: 6, kind: input, shape index: {}]
  %s7 = inlined_call_operand.vmem [shape: f32[96,32], index: 7, kind: input, shape index: {}]
  %s8 = inlined_call_operand.vmem [shape: f32[1,32], index: 8, kind: input, shape index: {}]
  %s9 = inlined_call_operand.vmem [shape: f32[1,32], index: 9, kind: input, shape index: {}]
  %s10 = inlined_call_operand.vmem [shape: f32[1,32], index: 10, kind: input, shape index: {}]
  %s11 = inlined_call_operand.vmem [shape: f32[96,32], index: 11, kind: input, shape index: {}]
  %s12 = inlined_call_operand.vmem [shape: f32[1,32], index: 12, kind: input, shape index: {}]
  %s13 = inlined_call_operand.vmem [shape: f32[64,32], index: 13, kind: output, shape index: {}]
  %s14 = sld [smem:[#allocation0]]
  $region85: #{tpu_custom_call.1} parent=0
    _
  %s16 = ssub.s32 1, %s14
  %s17 = scalar_select 0, %s16, %s14
  loop: start=0, step=1, limit=4
  $region2: #{tpu_custom_call.1} parent=0 // loop_pre_header
    _
  $region3: #{tpu_custom_call.1} parent=0 // loop_header
    %s19 = sphi 0, %s23
    %p20 = scmp.ge.s32.totalorder %s19, 4
    %s29 = sphi 0, %s31
    %s32 = sphi 0, %s29
    %s33 = sphi 0, %s32
    %s49 = sphi 0, %s33
    %s53 = sphi 0, %s53
    %s55 = sphi 0, %s53
    %s56 = sphi 0, %s55
    %s70 = sphi 0, %s56
    %s74 = sphi 0, %s74
    %s76 = sphi 0, %s74
    %s77 = sphi 0, %s76
    %s91 = sphi 0, %s77
    %s95 = sphi 0, %s95
    %s97 = sphi 0, %s95
    %s98 = sphi 0, %s97
    %s112 = sphi 0, %s98
    %s116 = sphi 0, %s116
    %s118 = sphi 0, %s116
    %s119 = sphi 0, %s118
    %s133 = sphi 0, %s119
    %s137 = sphi 0, %s137
    %s139 = sphi 0, %s137
    %s140 = sphi 0, %s139
    %s154 = sphi 0, %s140
    %s158 = sphi 0, %s158
    %s160 = sphi 0, %s158
    %s161 = sphi 0, %s160
    %s175 = sphi 0, %s161
    %s179 = sphi 0, %s179
    %s181 = sphi 0, %s179
    %s182 = sphi 0, %s181
    %s196 = sphi 0, %s182
    %s200 = sphi 0, %s200
    %s202 = sphi 0, %s200
    %s203 = sphi 0, %s202
    %s217 = sphi 0, %s203
    %s221 = sphi 0, %s221
    %s223 = sphi 0, %s221
    %s224 = sphi 0, %s223
    %s238 = sphi 0, %s224
    %s242 = sphi 0, %s242
    %s244 = sphi 0, %s242
    %s245 = sphi 0, %s244
    %s259 = sphi 0, %s245
    %s263 = sphi 0, %s263
    %s265 = sphi 0, %s263
    %s266 = sphi 0, %s265
    %s280 = sphi 0, %s266
    %s284 = sphi 0, %s284
    %s286 = sphi 0, %s284
    %s287 = sphi 0, %s286
    %s301 = sphi 0, %s287
    %s307 = sphi 0, %s309
    %s310 = sphi 0, %s307
    %s311 = sphi 0, %s310
    %s327 = sphi 0, %s311
  $region4: #{tpu_custom_call.1} parent=0 // loop_header_branch
    %22 = sbr.rel (%p20) target = $region8
  $region5: #{tpu_custom_call.1} parent=0 // loop_body
    %s24 = ssub.s32 %s19, 1
    %s25 = ssub.s32 %s19, 2
    %s26 = sadd.s32 %s19, 1
    %s27 = ssub.s32 %s19, %s26
    %p28 = scmp.eq.s32.totalorder %s27, 0
    %s30 = sadd.s32 %s29, 1
    %s31 = scalar_select %p28, %s29, %s30
    %p34 = pneg %p28
    %p35 = scmp.eq.s32.totalorder %s19, 1
    %p36 = por %p34, %p35
    %p37 = scmp.ne.s32.totalorder %s29, %s32
    %p38 = scmp.eq.s32.totalorder %s19, 0
    %p39 = por %p37, %p38
    %p40 = scmp.ne.s32.totalorder %s29, %s32
    %p41 = scmp.eq.s32.totalorder %s24, 1
    %p42 = por %p40, %p41
    %p43 = scmp.ne.s32.totalorder %s32, %s33
    %p44 = scmp.eq.s32.totalorder %s24, 0
    %p45 = por %p43, %p44
    %p46 = scmp.ne.s32.totalorder %s32, %s33
    %p47 = scmp.eq.s32.totalorder %s25, 1
    %p48 = por %p46, %p47
    %p50 = scmp.ne.s32.totalorder %s33, %s49
    %p51 = scmp.eq.s32.totalorder %s25, 0
    %p52 = por %p50, %p51
    %s54 = sadd.s32 %s53, 1
    %p57 = scmp.eq.s32.totalorder %s19, 1
    %p58 = scmp.ne.s32.totalorder %s53, %s55
    %p59 = scmp.eq.s32.totalorder %s19, 0
    %p60 = por %p58, %p59
    %p61 = scmp.ne.s32.totalorder %s53, %s55
    %p62 = scmp.eq.s32.totalorder %s24, 1
    %p63 = por %p61, %p62
    %p64 = scmp.ne.s32.totalorder %s55, %s56
    %p65 = scmp.eq.s32.totalorder %s24, 0
    %p66 = por %p64, %p65
    %p67 = scmp.ne.s32.totalorder %s55, %s56
    %p68 = scmp.eq.s32.totalorder %s25, 1
    %p69 = por %p67, %p68
    %p71 = scmp.ne.s32.totalorder %s56, %s70
    %p72 = scmp.eq.s32.totalorder %s25, 0
    %p73 = por %p71, %p72
    %s75 = sadd.s32 %s74, 1
    %p78 = scmp.eq.s32.totalorder %s19, 1
    %p79 = scmp.ne.s32.totalorder %s74, %s76
    %p80 = scmp.eq.s32.totalorder %s19, 0
    %p81 = por %p79, %p80
    %p82 = scmp.ne.s32.totalorder %s74, %s76
    %p83 = scmp.eq.s32.totalorder %s24, 1
    %p84 = por %p82, %p83
    %p85 = scmp.ne.s32.totalorder %s76, %s77
    %p86 = scmp.eq.s32.totalorder %s24, 0
    %p87 = por %p85, %p86
    %p88 = scmp.ne.s32.totalorder %s76, %s77
    %p89 = scmp.eq.s32.totalorder %s25, 1
    %p90 = por %p88, %p89
    %p92 = scmp.ne.s32.totalorder %s77, %s91
    %p93 = scmp.eq.s32.totalorder %s25, 0
    %p94 = por %p92, %p93
    %s96 = sadd.s32 %s95, 1
    %p99 = scmp.eq.s32.totalorder %s19, 1
    %p100 = scmp.ne.s32.totalorder %s95, %s97
    %p101 = scmp.eq.s32.totalorder %s19, 0
    %p102 = por %p100, %p101
    %p103 = scmp.ne.s32.totalorder %s95, %s97
    %p104 = scmp.eq.s32.totalorder %s24, 1
    %p105 = por %p103, %p104
    %p106 = scmp.ne.s32.totalorder %s97, %s98
    %p107 = scmp.eq.s32.totalorder %s24, 0
    %p108 = por %p106, %p107
    %p109 = scmp.ne.s32.totalorder %s97, %s98
    %p110 = scmp.eq.s32.totalorder %s25, 1
    %p111 = por %p109, %p110
    %p113 = scmp.ne.s32.totalorder %s98, %s112
    %p114 = scmp.eq.s32.totalorder %s25, 0
    %p115 = por %p113, %p114
    %s117 = sadd.s32 %s116, 1
    %p120 = scmp.eq.s32.totalorder %s19, 1
    %p121 = scmp.ne.s32.totalorder %s116, %s118
    %p122 = scmp.eq.s32.totalorder %s19, 0
    %p123 = por %p121, %p122
    %p124 = scmp.ne.s32.totalorder %s116, %s118
    %p125 = scmp.eq.s32.totalorder %s24, 1
    %p126 = por %p124, %p125
    %p127 = scmp.ne.s32.totalorder %s118, %s119
    %p128 = scmp.eq.s32.totalorder %s24, 0
    %p129 = por %p127, %p128
    %p130 = scmp.ne.s32.totalorder %s118, %s119
    %p131 = scmp.eq.s32.totalorder %s25, 1
    %p132 = por %p130, %p131
    %p134 = scmp.ne.s32.totalorder %s119, %s133
    %p135 = scmp.eq.s32.totalorder %s25, 0
    %p136 = por %p134, %p135
    %s138 = sadd.s32 %s137, 1
    %p141 = scmp.eq.s32.totalorder %s19, 1
    %p142 = scmp.ne.s32.totalorder %s137, %s139
    %p143 = scmp.eq.s32.totalorder %s19, 0
    %p144 = por %p142, %p143
    %p145 = scmp.ne.s32.totalorder %s137, %s139
    %p146 = scmp.eq.s32.totalorder %s24, 1
    %p147 = por %p145, %p146
    %p148 = scmp.ne.s32.totalorder %s139, %s140
    %p149 = scmp.eq.s32.totalorder %s24, 0
    %p150 = por %p148, %p149
    %p151 = scmp.ne.s32.totalorder %s139, %s140
    %p152 = scmp.eq.s32.totalorder %s25, 1
    %p153 = por %p151, %p152
    %p155 = scmp.ne.s32.totalorder %s140, %s154
    %p156 = scmp.eq.s32.totalorder %s25, 0
    %p157 = por %p155, %p156
    %s159 = sadd.s32 %s158, 1
    %p162 = scmp.eq.s32.totalorder %s19, 1
    %p163 = scmp.ne.s32.totalorder %s158, %s160
    %p164 = scmp.eq.s32.totalorder %s19, 0
    %p165 = por %p163, %p164
    %p166 = scmp.ne.s32.totalorder %s158, %s160
    %p167 = scmp.eq.s32.totalorder %s24, 1
    %p168 = por %p166, %p167
    %p169 = scmp.ne.s32.totalorder %s160, %s161
    %p170 = scmp.eq.s32.totalorder %s24, 0
    %p171 = por %p169, %p170
    %p172 = scmp.ne.s32.totalorder %s160, %s161
    %p173 = scmp.eq.s32.totalorder %s25, 1
    %p174 = por %p172, %p173
    %p176 = scmp.ne.s32.totalorder %s161, %s175
    %p177 = scmp.eq.s32.totalorder %s25, 0
    %p178 = por %p176, %p177
    %s180 = sadd.s32 %s179, 1
    %p183 = scmp.eq.s32.totalorder %s19, 1
    %p184 = scmp.ne.s32.totalorder %s179, %s181
    %p185 = scmp.eq.s32.totalorder %s19, 0
    %p186 = por %p184, %p185
    %p187 = scmp.ne.s32.totalorder %s179, %s181
    %p188 = scmp.eq.s32.totalorder %s24, 1
    %p189 = por %p187, %p188
    %p190 = scmp.ne.s32.totalorder %s181, %s182
    %p191 = scmp.eq.s32.totalorder %s24, 0
    %p192 = por %p190, %p191
    %p193 = scmp.ne.s32.totalorder %s181, %s182
    %p194 = scmp.eq.s32.totalorder %s25, 1
    %p195 = por %p193, %p194
    %p197 = scmp.ne.s32.totalorder %s182, %s196
    %p198 = scmp.eq.s32.totalorder %s25, 0
    %p199 = por %p197, %p198
    %s201 = sadd.s32 %s200, 1
    %p204 = scmp.eq.s32.totalorder %s19, 1
    %p205 = scmp.ne.s32.totalorder %s200, %s202
    %p206 = scmp.eq.s32.totalorder %s19, 0
    %p207 = por %p205, %p206
    %p208 = scmp.ne.s32.totalorder %s200, %s202
    %p209 = scmp.eq.s32.totalorder %s24, 1
    %p210 = por %p208, %p209
    %p211 = scmp.ne.s32.totalorder %s202, %s203
    %p212 = scmp.eq.s32.totalorder %s24, 0
    %p213 = por %p211, %p212
    %p214 = scmp.ne.s32.totalorder %s202, %s203
    %p215 = scmp.eq.s32.totalorder %s25, 1
    %p216 = por %p214, %p215
    %p218 = scmp.ne.s32.totalorder %s203, %s217
    %p219 = scmp.eq.s32.totalorder %s25, 0
    %p220 = por %p218, %p219
    %s222 = sadd.s32 %s221, 1
    %p225 = scmp.eq.s32.totalorder %s19, 1
    %p226 = scmp.ne.s32.totalorder %s221, %s223
    %p227 = scmp.eq.s32.totalorder %s19, 0
    %p228 = por %p226, %p227
    %p229 = scmp.ne.s32.totalorder %s221, %s223
    %p230 = scmp.eq.s32.totalorder %s24, 1
    %p231 = por %p229, %p230
    %p232 = scmp.ne.s32.totalorder %s223, %s224
    %p233 = scmp.eq.s32.totalorder %s24, 0
    %p234 = por %p232, %p233
    %p235 = scmp.ne.s32.totalorder %s223, %s224
    %p236 = scmp.eq.s32.totalorder %s25, 1
    %p237 = por %p235, %p236
    %p239 = scmp.ne.s32.totalorder %s224, %s238
    %p240 = scmp.eq.s32.totalorder %s25, 0
    %p241 = por %p239, %p240
    %s243 = sadd.s32 %s242, 1
    %p246 = scmp.eq.s32.totalorder %s19, 1
    %p247 = scmp.ne.s32.totalorder %s242, %s244
    %p248 = scmp.eq.s32.totalorder %s19, 0
    %p249 = por %p247, %p248
    %p250 = scmp.ne.s32.totalorder %s242, %s244
    %p251 = scmp.eq.s32.totalorder %s24, 1
    %p252 = por %p250, %p251
    %p253 = scmp.ne.s32.totalorder %s244, %s245
    %p254 = scmp.eq.s32.totalorder %s24, 0
    %p255 = por %p253, %p254
    %p256 = scmp.ne.s32.totalorder %s244, %s245
    %p257 = scmp.eq.s32.totalorder %s25, 1
    %p258 = por %p256, %p257
    %p260 = scmp.ne.s32.totalorder %s245, %s259
    %p261 = scmp.eq.s32.totalorder %s25, 0
    %p262 = por %p260, %p261
    %s264 = sadd.s32 %s263, 1
    %p267 = scmp.eq.s32.totalorder %s19, 1
    %p268 = scmp.ne.s32.totalorder %s263, %s265
    %p269 = scmp.eq.s32.totalorder %s19, 0
    %p270 = por %p268, %p269
    %p271 = scmp.ne.s32.totalorder %s263, %s265
    %p272 = scmp.eq.s32.totalorder %s24, 1
    %p273 = por %p271, %p272
    %p274 = scmp.ne.s32.totalorder %s265, %s266
    %p275 = scmp.eq.s32.totalorder %s24, 0
    %p276 = por %p274, %p275
    %p277 = scmp.ne.s32.totalorder %s265, %s266
    %p278 = scmp.eq.s32.totalorder %s25, 1
    %p279 = por %p277, %p278
    %p281 = scmp.ne.s32.totalorder %s266, %s280
    %p282 = scmp.eq.s32.totalorder %s25, 0
    %p283 = por %p281, %p282
    %s285 = sadd.s32 %s284, 1
    %p288 = scmp.eq.s32.totalorder %s19, 1
    %p289 = scmp.ne.s32.totalorder %s284, %s286
    %p290 = scmp.eq.s32.totalorder %s19, 0
    %p291 = por %p289, %p290
    %p292 = scmp.ne.s32.totalorder %s284, %s286
    %p293 = scmp.eq.s32.totalorder %s24, 1
    %p294 = por %p292, %p293
    %p295 = scmp.ne.s32.totalorder %s286, %s287
    %p296 = scmp.eq.s32.totalorder %s24, 0
    %p297 = por %p295, %p296
    %p298 = scmp.ne.s32.totalorder %s286, %s287
    %p299 = scmp.eq.s32.totalorder %s25, 1
    %p300 = por %p298, %p299
    %p302 = scmp.ne.s32.totalorder %s287, %s301
    %p303 = scmp.eq.s32.totalorder %s25, 0
    %p304 = por %p302, %p303
    %s305 = ssub.s32 %s19, %s26
    %p306 = scmp.eq.s32.totalorder %s305, 0
    %s308 = sadd.s32 %s307, 1
    %s309 = scalar_select %p306, %s307, %s308
    %p312 = pneg %p306
    %p313 = scmp.eq.s32.totalorder %s19, 1
    %p314 = por %p312, %p313
    %p315 = scmp.ne.s32.totalorder %s307, %s310
    %p316 = scmp.eq.s32.totalorder %s19, 0
    %p317 = por %p315, %p316
    %p318 = scmp.ne.s32.totalorder %s307, %s310
    %p319 = scmp.eq.s32.totalorder %s24, 1
    %p320 = por %p318, %p319
    %p321 = scmp.ne.s32.totalorder %s310, %s311
    %p322 = scmp.eq.s32.totalorder %s24, 0
    %p323 = por %p321, %p322
    %p324 = scmp.ne.s32.totalorder %s310, %s311
    %p325 = scmp.eq.s32.totalorder %s25, 1
    %p326 = por %p324, %p325
    %p328 = scmp.ne.s32.totalorder %s311, %s327
    %p329 = scmp.eq.s32.totalorder %s25, 0
    %p330 = por %p328, %p329
    %p331 = scmp.le.s32.totalorder 1, %s19
    %p332 = scmp.lt.s32.totalorder %s19, 3
    %p333 = pnand %p331, %p332
    %p334 = pneg %p333
    // Predicated region
    $region9: #{tpu_custom_call.1} parent=5 // pred_check
      _
    $region10: #{tpu_custom_call.1} parent=5 // pred_check_branch
      %336 = sbr.rel (%p333) target = $region12
    $region11: #{tpu_custom_call.1} parent=5 // pred_region
      %s337 = ssub.s32 %s19, 1
      // Predicated region
      $region13: #{tpu_custom_call.1} parent=11 // pred_check
        %p338 = pneg %p66
      $region14: #{tpu_custom_call.1} parent=11 // pred_check_branch
        %340 = sbr.rel (%p338) target = $region16
      $region15: #{tpu_custom_call.1} parent=11 // pred_region
        _
      $region16: #{tpu_custom_call.1} parent=11 // pred_fallthru
        _
      // Predicated region
      $region17: #{tpu_custom_call.1} parent=11 // pred_check
        %p341 = pneg %p87
      $region18: #{tpu_custom_call.1} parent=11 // pred_check_branch
        %343 = sbr.rel (%p341) target = $region20
      $region19: #{tpu_custom_call.1} parent=11 // pred_region
        _
      $region20: #{tpu_custom_call.1} parent=11 // pred_fallthru
        _
      // Predicated region
      $region21: #{tpu_custom_call.1} parent=11 // pred_check
        %p344 = pneg %p108
      $region22: #{tpu_custom_call.1} parent=11 // pred_check_branch
        %346 = sbr.rel (%p344) target = $region24
      $region23: #{tpu_custom_call.1} parent=11 // pred_region
        _
      $region24: #{tpu_custom_call.1} parent=11 // pred_fallthru
        _
      // Predicated region
      $region25: #{tpu_custom_call.1} parent=11 // pred_check
        %p347 = pneg %p129
      $region26: #{tpu_custom_call.1} parent=11 // pred_check_branch
        %349 = sbr.rel (%p347) target = $region28
      $region27: #{tpu_custom_call.1} parent=11 // pred_region
        _
      $region28: #{tpu_custom_call.1} parent=11 // pred_fallthru
        _
      // Predicated region
      $region29: #{tpu_custom_call.1} parent=11 // pred_check
        %p350 = pneg %p150
      $region30: #{tpu_custom_call.1} parent=11 // pred_check_branch
        %352 = sbr.rel (%p350) target = $region32
      $region31: #{tpu_custom_call.1} parent=11 // pred_region
        _
      $region32: #{tpu_custom_call.1} parent=11 // pred_fallthru
        _
      // Predicated region
      $region33: #{tpu_custom_call.1} parent=11 // pred_check
        %p353 = pneg %p171
      $region34: #{tpu_custom_call.1} parent=11 // pred_check_branch
        %355 = sbr.rel (%p353) target = $region36
      $region35: #{tpu_custom_call.1} parent=11 // pred_region
        _
      $region36: #{tpu_custom_call.1} parent=11 // pred_fallthru
        _
      // Predicated region
      $region37: #{tpu_custom_call.1} parent=11 // pred_check
        %p356 = pneg %p192
      $region38: #{tpu_custom_call.1} parent=11 // pred_check_branch
        %358 = sbr.rel (%p356) target = $region40
      $region39: #{tpu_custom_call.1} parent=11 // pred_region
        _
      $region40: #{tpu_custom_call.1} parent=11 // pred_fallthru
        _
      // Predicated region
      $region41: #{tpu_custom_call.1} parent=11 // pred_check
        %p359 = pneg %p213
      $region42: #{tpu_custom_call.1} parent=11 // pred_check_branch
        %361 = sbr.rel (%p359) target = $region44
      $region43: #{tpu_custom_call.1} parent=11 // pred_region
        _
      $region44: #{tpu_custom_call.1} parent=11 // pred_fallthru
        _
      // Predicated region
      $region45: #{tpu_custom_call.1} parent=11 // pred_check
        %p362 = pneg %p234
      $region46: #{tpu_custom_call.1} parent=11 // pred_check_branch
        %364 = sbr.rel (%p362) target = $region48
      $region47: #{tpu_custom_call.1} parent=11 // pred_region
        _
      $region48: #{tpu_custom_call.1} parent=11 // pred_fallthru
        _
      // Predicated region
      $region49: #{tpu_custom_call.1} parent=11 // pred_check
        %p365 = pneg %p255
      $region50: #{tpu_custom_call.1} parent=11 // pred_check_branch
        %367 = sbr.rel (%p365) target = $region52
      $region51: #{tpu_custom_call.1} parent=11 // pred_region
        _
      $region52: #{tpu_custom_call.1} parent=11 // pred_fallthru
        _
      // Predicated region
      $region53: #{tpu_custom_call.1} parent=11 // pred_check
        %p368 = pneg %p276
      $region54: #{tpu_custom_call.1} parent=11 // pred_check_branch
        %370 = sbr.rel (%p368) target = $region56
      $region55: #{tpu_custom_call.1} parent=11 // pred_region
        _
      $region56: #{tpu_custom_call.1} parent=11 // pred_fallthru
        _
      // Predicated region
      $region57: #{tpu_custom_call.1} parent=11 // pred_check
        %p371 = pneg %p297
      $region58: #{tpu_custom_call.1} parent=11 // pred_check_branch
        %373 = sbr.rel (%p371) target = $region60
      $region59: #{tpu_custom_call.1} parent=11 // pred_region
        _
      $region60: #{tpu_custom_call.1} parent=11 // pred_fallthru
        _
    $region12: #{tpu_custom_call.1} parent=5 // pred_fallthru
      _
    %p374 = scmp.lt.s32.totalorder %s19, 2
    // Predicated region
    $region61: #{tpu_custom_call.1} parent=5 // pred_check
      %p375 = pneg %p374
    $region62: #{tpu_custom_call.1} parent=5 // pred_check_branch
      %377 = sbr.rel (%p375) target = $region64
    $region63: #{tpu_custom_call.1} parent=5 // pred_region
      // Predicated region
      $region65: #{tpu_custom_call.1} parent=63 // pred_check
        %p378 = pneg %p39
      $region66: #{tpu_custom_call.1} parent=63 // pred_check_branch
        %380 = sbr.rel (%p378) target = $region68
      $region67: #{tpu_custom_call.1} parent=63 // pred_region
        %s381 = smul.u32 4, %s19
        %p382 = scmp.lt.s32.totalorder %s381, 7
        %s383 = scalar_select %p382, %s381, 7
        %s384 = smul.addr %s383, 8
        %s385 = scalar_lea.vmem %s0, %s384
        %s386 = smul.u32 4, %s19
      $region68: #{tpu_custom_call.1} parent=63 // pred_fallthru
        _
    $region64: #{tpu_custom_call.1} parent=5 // pred_fallthru
      _
    %p387 = scmp.le.s32.totalorder 1, %s19
    %p388 = scmp.lt.s32.totalorder %s19, 3
    %p389 = pnand %p387, %p388
    %p390 = pneg %p389
    // Predicated region
    $region69: #{tpu_custom_call.1} parent=5 // pred_check
      _
    $region70: #{tpu_custom_call.1} parent=5 // pred_check_branch
      %392 = sbr.rel (%p389) target = $region72
    $region71: #{tpu_custom_call.1} parent=5 // pred_region
      %s393 = ssub.s32 %s19, 1
      %s394 = smul.u32 4, %s24
      %p395 = scmp.lt.s32.totalorder %s394, 7
      %s396 = scalar_select %p395, %s394, 7
      %s397 = smul.addr %s396, 8
      %s398 = scalar_lea.vmem %s0, %s397
      %p399 = pneg %p45
      %p400 = pneg %p42
      %p401 = pneg %p66
      %p402 = pneg %p63
      %p403 = pneg %p87
      %p404 = pneg %p84
      %p405 = pneg %p108
      %p406 = pneg %p105
      %p407 = pneg %p129
      %p408 = pneg %p126
      %p409 = pneg %p150
      %p410 = pneg %p147
      %p411 = pneg %p171
      %p412 = pneg %p168
      %p413 = pneg %p192
      %p414 = pneg %p189
      %p415 = pneg %p213
      %p416 = pneg %p210
      %p417 = pneg %p234
      %p418 = pneg %p231
      %p419 = pneg %p255
      %p420 = pneg %p252
      %p421 = pneg %p276
      %p422 = pneg %p273
      %p423 = pneg %p297
      %p424 = pneg %p294
      %p425 = pneg %p323
      %p426 = pneg %p320
      %s427 = smul.u32 4, %s24
      %p428 = scmp.lt.s32.totalorder %s427, 7
      %s429 = scalar_select %p428, %s427, 7
      %s430 = smul.addr %s429, 8
      %s431 = scalar_lea.vmem %s13, %s430
      %s432 = smul.u32 4, %s24
      %p433 = scmp.lt.s32.totalorder %s432, 7
      %s434 = scalar_select %p433, %s432, 7
      %s435 = smul.addr %s434, 8
      %s436 = scalar_lea.vmem %s0, %s435
      %s437 = smul.u32 4, %s24
      %s438 = smul.u32 4, %s24
      %p439 = scmp.lt.s32.totalorder %s438, 7
      %s440 = scalar_select %p439, %s438, 7
      %s441 = smul.addr %s440, 8
      %s442 = scalar_lea.vmem %s13, %s441
      %s443 = smul.u32 4, %s24
      %v444 = vld [vmem:[%s436] sm:$0xff]
      %v445 = vld [vmem:[%s436 + $0x8] sm:$0xff]
      %v446 = vld [vmem:[%s436 + $0x10] sm:$0xff]
      %v447 = vld [vmem:[%s436 + $0x18] sm:$0xff]
      %vm448 = vcmask 261120
      %v449 = vsel %vm448, %v444, 0.0
      %450 = vadd.xlane.f32.xlu0 %v449
      %v451 = vpop.xlane.xlu0 %450
      %v452 = vsel %vm448, %v445, 0.0
      %453 = vadd.xlane.f32.xlu0 %v452
      %v454 = vpop.xlane.xlu0 %453
      %v455 = vsel %vm448, %v446, 0.0
      %456 = vadd.xlane.f32.xlu0 %v455
      %v457 = vpop.xlane.xlu0 %456
      %v458 = vsel %vm448, %v447, 0.0
      %459 = vadd.xlane.f32.xlu0 %v458
      %v460 = vpop.xlane.xlu0 %459
      %v461 = vrcp.pop 32.0
      %v462 = vmul.f32 %v451, %v461
      %v463 = vmul.f32 %v454, %v461
      %v464 = vmul.f32 %v457, %v461
      %v465 = vmul.f32 %v460, %v461
      %v466 = vmul.f32 %v444, %v444
      %v467 = vmul.f32 %v445, %v445
      %v468 = vmul.f32 %v446, %v446
      %v469 = vmul.f32 %v447, %v447
      %v470 = vsel %vm448, %v466, 0.0
      %471 = vadd.xlane.f32.xlu0 %v470
      %v472 = vpop.xlane.xlu0 %471
      %v473 = vsel %vm448, %v467, 0.0
      %474 = vadd.xlane.f32.xlu0 %v473
      %v475 = vpop.xlane.xlu0 %474
      %v476 = vsel %vm448, %v468, 0.0
      %477 = vadd.xlane.f32.xlu0 %v476
      %v478 = vpop.xlane.xlu0 %477
      %v479 = vsel %vm448, %v469, 0.0
      %480 = vadd.xlane.f32.xlu0 %v479
      %v481 = vpop.xlane.xlu0 %480
      %v482 = vmul.f32 %v472, %v461
      %v483 = vmul.f32 %v475, %v461
      %v484 = vmul.f32 %v478, %v461
      %v485 = vmul.f32 %v481, %v461
      %v486 = vmul.f32 %v462, %v462
      %v487 = vmul.f32 %v463, %v463
      %v488 = vmul.f32 %v464, %v464
      %v489 = vmul.f32 %v465, %v465
      %v490 = vsub.f32 %v482, %v486
      %v491 = vsub.f32 %v483, %v487
      %v492 = vsub.f32 %v484, %v488
      %v493 = vsub.f32 %v485, %v489
      %v494 = vadd.f32 %v490, 1e-05
      %v495 = vadd.f32 %v491, 1e-05
      %v496 = vadd.f32 %v492, 1e-05
      %v497 = vadd.f32 %v493, 1e-05
      %v498 = vrsqrt.pop %v494
      %v499 = vrsqrt.pop %v495
      %v500 = vrsqrt.pop %v496
      %v501 = vrsqrt.pop %v497
      %v502 = vsub.f32 %v444, %v462
      %v503 = vsub.f32 %v445, %v463
      %v504 = vsub.f32 %v446, %v464
      %v505 = vsub.f32 %v447, %v465
      %v506 = vmul.f32 %v502, %v498
      %v507 = vmul.f32 %v503, %v499
      %v508 = vmul.f32 %v504, %v500
      %v509 = vmul.f32 %v505, %v501
      %v510 = vld [vmem:[%s1] sm:$0x1]
      %v512 = vlaneseq
      %v513 = vshrl.u32 %v512, 7
      %v514 = vsub.s32 0, %v513
      %v515 = vrot.slane %v510, %v514
      %v517 = vmul.f32 %v506, %v515
      %v518 = vmul.f32 %v507, %v515
      %v519 = vmul.f32 %v508, %v515
      %v520 = vmul.f32 %v509, %v515
      %v521 = vld [vmem:[%s2] sm:$0x1]
      %v523 = vlaneseq
      %v524 = vshrl.u32 %v523, 7
      %v525 = vsub.s32 0, %v524
      %v526 = vrot.slane %v521, %v525
      %v528 = vadd.f32 %v517, %v526
      %v529 = vadd.f32 %v518, %v526
      %v530 = vadd.f32 %v519, %v526
      %v531 = vadd.f32 %v520, %v526
      %vm536 = vcmask 1043456
      %v537 = vrot.slane %v528, 4
      %v538 = vrot.slane %v529, 4
      %v539 = vsel %vm536, %v537, %v538
      %v540 = vrot.slane %v530, 4
      %v541 = vsel %vm536, %v538, %v540
      %v542 = vrot.slane %v531, 4
      %v543 = vsel %vm536, %v540, %v542
      %v548 = vsel %vm536, 0.0, %v537
      %v550 = vsel %vm536, %v542, 0.0
      %551 = vrot.lane.b32.xlu0 %v528, 32
      %v552 = vpop.permute.xlu0 %551
      %553 = vrot.lane.b32.xlu0 %v529, 32
      %v554 = vpop.permute.xlu0 %553
      %555 = vrot.lane.b32.xlu0 %v530, 32
      %v556 = vpop.permute.xlu0 %555
      %557 = vrot.lane.b32.xlu0 %v531, 32
      %v558 = vpop.permute.xlu0 %557
      %564 = vrot.lane.b32.xlu0 %v539, 64
      %v565 = vpop.permute.xlu0 %564
      %566 = vrot.lane.b32.xlu0 %v541, 64
      %v567 = vpop.permute.xlu0 %566
      %568 = vrot.lane.b32.xlu0 %v543, 64
      %v569 = vpop.permute.xlu0 %568
      %570 = vrot.lane.b32.xlu0 %v550, 64
      %v571 = vpop.permute.xlu0 %570
      %v576 = vsel %vm448, %v548, %v552
      %v577 = vsel %vm448, %v539, %v554
      %v578 = vsel %vm448, %v541, %v556
      %v579 = vsel %vm448, %v543, %v558
      %vm580 = vcmask 523264
      %v581 = vsel %vm580, %v576, %v565
      %v582 = vsel %vm580, %v577, %v567
      %v583 = vsel %vm580, %v578, %v569
      %v584 = vsel %vm580, %v579, %v571
      %v585 = vld [vmem:[%s3] sm:$0xff]
      %v586 = vld [vmem:[%s3 + $0x8] sm:$0xff]
      %v587 = vld [vmem:[%s3 + $0x10] sm:$0xff]
      %v588 = vld [vmem:[%s3 + $0x18] sm:$0xff]
      %v589 = vld [vmem:[%s3 + $0x20] sm:$0xff]
      %v590 = vld [vmem:[%s3 + $0x28] sm:$0xff]
      %v591 = vld [vmem:[%s3 + $0x30] sm:$0xff]
      %v592 = vld [vmem:[%s3 + $0x38] sm:$0xff]
      %v593 = vld [vmem:[%s3 + $0x40] sm:$0xff]
      %v594 = vld [vmem:[%s3 + $0x48] sm:$0xff]
      %v595 = vld [vmem:[%s3 + $0x50] sm:$0xff]
      %v596 = vld [vmem:[%s3 + $0x58] sm:$0xff]
      %v597 = vld [vmem:[%s4] sm:$0x1]
      %v599 = vlaneseq
      %v600 = vshrl.u32 %v599, 7
      %v601 = vsub.s32 0, %v600
      %v602 = vrot.slane %v597, %v601
      %vm604 = vcmask 785408
      %v606 = vsel %vm604, %v581, 0
      %v609 = vsel %vm604, %v582, 0
      %v612 = vsel %vm604, %v583, 0
      %v615 = vsel %vm604, %v584, 0
      %617 = vmatprep.subr.mxu0 0.0
      %618 = vmatpush1.msra.mxu0 0.0
      %619 = vmatprep.subr.mxu0 0.0
      %620 = vmatpush1.msra.mxu0 0.0
      %621 = vmatprep.subr.mxu0 0.0
      %622 = vmatpush1.msra.mxu0 0.0
      %623 = vmatprep.subr.mxu0 0.0
      %624 = vmatpush1.msra.mxu0 0.0
      %625 = vmatprep.subr.mxu0 0.0
      %626 = vmatpush1.msra.mxu0 %v596
      %627 = vmatprep.subr.mxu0 0.0
      %628 = vmatpush1.msra.mxu0 %v595
      %629 = vmatprep.subr.mxu0 0.0
      %630 = vmatpush1.msra.mxu0 %v594
      %631 = vmatprep.subr.mxu0 0.0
      %632 = vmatpush1.msra.mxu0 %v593
      %633 = vmatprep.subr.mxu0 0.0
      %634 = vmatpush1.msra.mxu0 %v592
      %635 = vmatprep.subr.mxu0 0.0
      %636 = vmatpush1.msra.mxu0 %v591
      %637 = vmatprep.subr.mxu0 0.0
      %638 = vmatpush1.msra.mxu0 %v590
      %639 = vmatprep.subr.mxu0 0.0
      %640 = vmatpush1.msra.mxu0 %v589
      %641 = vmatprep.subr.mxu0 0.0
      %642 = vmatpush1.msra.mxu0 %v588
      %643 = vmatprep.subr.mxu0 0.0
      %644 = vmatpush1.msra.mxu0 %v587
      %645 = vmatprep.subr.mxu0 0.0
      %646 = vmatpush1.msra.mxu0 %v586
      %647 = vmatprep.subr.mxu0 0.0
      %648 = vmatpush1.msra.mxu0 %v585
      %649 = vmatprep.subr.mxu0 0.0
      %650 = vmatpush2.msra.mxu0 0.0
      %651 = vmatprep.subr.mxu0 0.0
      %652 = vmatpush2.msra.mxu0 0.0
      %653 = vmatprep.subr.mxu0 0.0
      %654 = vmatpush2.msra.mxu0 0.0
      %655 = vmatprep.subr.mxu0 0.0
      %656 = vmatpush2.msra.mxu0 0.0
      %657 = vmatprep.subr.mxu0 0.0
      %658 = vmatpush2.msra.mxu0 0.0
      %659 = vmatprep.subr.mxu0 0.0
      %660 = vmatpush2.msra.mxu0 0.0
      %661 = vmatprep.subr.mxu0 0.0
      %662 = vmatpush2.msra.mxu0 0.0
      %663 = vmatprep.subr.mxu0 0.0
      %664 = vmatpush2.msra.mxu0 0.0
      %665 = vmatprep.subr.mxu0 0.0
      %666 = vmatpush2.msra.mxu0 0.0
      %667 = vmatprep.subr.mxu0 0.0
      %668 = vmatpush2.msra.mxu0 0.0
      %669 = vmatprep.subr.mxu0 0.0
      %670 = vmatpush2.msra.mxu0 0.0
      %671 = vmatprep.subr.mxu0 0.0
      %672 = vmatpush2.msra.mxu0 0.0
      %673 = vmatprep.subr.mxu0 0.0
      %674 = vmatpush2.msra.mxu0 0.0
      %675 = vmatprep.subr.mxu0 0.0
      %676 = vmatpush2.msra.mxu0 0.0
      %677 = vmatprep.subr.mxu0 0.0
      %678 = vmatpush2.msra.mxu0 0.0
      %679 = vmatprep.subr.mxu0 0.0
      %680 = vmatpush2.msra.mxu0 0.0
      %681 = vmatprep.mubr.f32.mxu0 0.0
      %682 = vmatmul.mubr.f32.gmra.mxu0 %v606
      %v683 = vpop.f32.mrf.mxu0
      %v684 = vadd.f32 %v602, %v683
      %v685 = vpop.f32.mrf.mxu0
      %686 = vmatprep.mubr.f32.mxu0 0.0
      %687 = vmatmul.mubr.f32.gmra.mxu0 %v609
      %v688 = vpop.f32.mrf.mxu0
      %v689 = vadd.f32 %v602, %v688
      %v690 = vpop.f32.mrf.mxu0
      %691 = vmatprep.mubr.f32.mxu0 0.0
      %692 = vmatmul.mubr.f32.gmra.mxu0 %v612
      %v693 = vpop.f32.mrf.mxu0
      %v694 = vadd.f32 %v602, %v693
      %v695 = vpop.f32.mrf.mxu0
      %696 = vmatprep.mubr.f32.mxu0 0.0
      %697 = vmatmul.mubr.f32.gmra.mxu0 %v615
      %v698 = vpop.f32.mrf.mxu0
      %v699 = vadd.f32 %v602, %v698
      %v700 = vpop.f32.mrf.mxu0
      %701 = vdwg.mxu0
      %v702 = vmax.f32 %v684, 0.0
      %v703 = vmax.f32 %v689, 0.0
      %v704 = vmax.f32 %v694, 0.0
      %v705 = vmax.f32 %v699, 0.0
      %v706 = vsel %vm448, %v702, 0.0
      %707 = vadd.xlane.f32.xlu0 %v706
      %v708 = vpop.xlane.xlu0 %707
      %v709 = vsel %vm448, %v703, 0.0
      %710 = vadd.xlane.f32.xlu0 %v709
      %v711 = vpop.xlane.xlu0 %710
      %v712 = vsel %vm448, %v704, 0.0
      %713 = vadd.xlane.f32.xlu0 %v712
      %v714 = vpop.xlane.xlu0 %713
      %v715 = vsel %vm448, %v705, 0.0
      %716 = vadd.xlane.f32.xlu0 %v715
      %v717 = vpop.xlane.xlu0 %716
      %v718 = vmul.f32 %v708, %v461
      %v719 = vmul.f32 %v711, %v461
      %v720 = vmul.f32 %v714, %v461
      %v721 = vmul.f32 %v717, %v461
      %v722 = vmul.f32 %v702, %v702
      %v723 = vmul.f32 %v703, %v703
      %v724 = vmul.f32 %v704, %v704
      %v725 = vmul.f32 %v705, %v705
      %v726 = vsel %vm448, %v722, 0.0
      %727 = vadd.xlane.f32.xlu0 %v726
      %v728 = vpop.xlane.xlu0 %727
      %v729 = vsel %vm448, %v723, 0.0
      %730 = vadd.xlane.f32.xlu0 %v729
      %v731 = vpop.xlane.xlu0 %730
      %v732 = vsel %vm448, %v724, 0.0
      %733 = vadd.xlane.f32.xlu0 %v732
      %v734 = vpop.xlane.xlu0 %733
      %v735 = vsel %vm448, %v725, 0.0
      %736 = vadd.xlane.f32.xlu0 %v735
      %v737 = vpop.xlane.xlu0 %736
      %v738 = vmul.f32 %v728, %v461
      %v739 = vmul.f32 %v731, %v461
      %v740 = vmul.f32 %v734, %v461
      %v741 = vmul.f32 %v737, %v461
      %v742 = vmul.f32 %v718, %v718
      %v743 = vmul.f32 %v719, %v719
      %v744 = vmul.f32 %v720, %v720
      %v745 = vmul.f32 %v721, %v721
      %v746 = vsub.f32 %v738, %v742
      %v747 = vsub.f32 %v739, %v743
      %v748 = vsub.f32 %v740, %v744
      %v749 = vsub.f32 %v741, %v745
      %v750 = vadd.f32 %v746, 1e-05
      %v751 = vadd.f32 %v747, 1e-05
      %v752 = vadd.f32 %v748, 1e-05
      %v753 = vadd.f32 %v749, 1e-05
      %v754 = vrsqrt.pop %v750
      %v755 = vrsqrt.pop %v751
      %v756 = vrsqrt.pop %v752
      %v757 = vrsqrt.pop %v753
      %v758 = vsub.f32 %v702, %v718
      %v759 = vsub.f32 %v703, %v719
      %v760 = vsub.f32 %v704, %v720
      %v761 = vsub.f32 %v705, %v721
      %v762 = vmul.f32 %v758, %v754
      %v763 = vmul.f32 %v759, %v755
      %v764 = vmul.f32 %v760, %v756
      %v765 = vmul.f32 %v761, %v757
      %v766 = vld [vmem:[%s5] sm:$0x1]
      %v768 = vlaneseq
      %v769 = vshrl.u32 %v768, 7
      %v770 = vsub.s32 0, %v769
      %v771 = vrot.slane %v766, %v770
      %v773 = vmul.f32 %v762, %v771
      %v774 = vmul.f32 %v763, %v771
      %v775 = vmul.f32 %v764, %v771
      %v776 = vmul.f32 %v765, %v771
      %v777 = vld [vmem:[%s6] sm:$0x1]
      %v779 = vlaneseq
      %v780 = vshrl.u32 %v779, 7
      %v781 = vsub.s32 0, %v780
      %v782 = vrot.slane %v777, %v781
      %v784 = vadd.f32 %v773, %v782
      %v785 = vadd.f32 %v774, %v782
      %v786 = vadd.f32 %v775, %v782
      %v787 = vadd.f32 %v776, %v782
      %v792 = vrot.slane %v784, 4
      %v793 = vrot.slane %v785, 4
      %v794 = vsel %vm536, %v792, %v793
      %v795 = vrot.slane %v786, 4
      %v796 = vsel %vm536, %v793, %v795
      %v797 = vrot.slane %v787, 4
      %v798 = vsel %vm536, %v795, %v797
      %v803 = vsel %vm536, 0.0, %v792
      %v805 = vsel %vm536, %v797, 0.0
      %806 = vrot.lane.b32.xlu0 %v784, 32
      %v807 = vpop.permute.xlu0 %806
      %808 = vrot.lane.b32.xlu0 %v785, 32
      %v809 = vpop.permute.xlu0 %808
      %810 = vrot.lane.b32.xlu0 %v786, 32
      %v811 = vpop.permute.xlu0 %810
      %812 = vrot.lane.b32.xlu0 %v787, 32
      %v813 = vpop.permute.xlu0 %812
      %819 = vrot.lane.b32.xlu0 %v794, 64
      %v820 = vpop.permute.xlu0 %819
      %821 = vrot.lane.b32.xlu0 %v796, 64
      %v822 = vpop.permute.xlu0 %821
      %823 = vrot.lane.b32.xlu0 %v798, 64
      %v824 = vpop.permute.xlu0 %823
      %825 = vrot.lane.b32.xlu0 %v805, 64
      %v826 = vpop.permute.xlu0 %825
      %v831 = vsel %vm448, %v803, %v807
      %v832 = vsel %vm448, %v794, %v809
      %v833 = vsel %vm448, %v796, %v811
      %v834 = vsel %vm448, %v798, %v813
      %v835 = vsel %vm580, %v831, %v820
      %v836 = vsel %vm580, %v832, %v822
      %v837 = vsel %vm580, %v833, %v824
      %v838 = vsel %vm580, %v834, %v826
      %v839 = vld [vmem:[%s7] sm:$0xff]
      %v840 = vld [vmem:[%s7 + $0x8] sm:$0xff]
      %v841 = vld [vmem:[%s7 + $0x10] sm:$0xff]
      %v842 = vld [vmem:[%s7 + $0x18] sm:$0xff]
      %v843 = vld [vmem:[%s7 + $0x20] sm:$0xff]
      %v844 = vld [vmem:[%s7 + $0x28] sm:$0xff]
      %v845 = vld [vmem:[%s7 + $0x30] sm:$0xff]
      %v846 = vld [vmem:[%s7 + $0x38] sm:$0xff]
      %v847 = vld [vmem:[%s7 + $0x40] sm:$0xff]
      %v848 = vld [vmem:[%s7 + $0x48] sm:$0xff]
      %v849 = vld [vmem:[%s7 + $0x50] sm:$0xff]
      %v850 = vld [vmem:[%s7 + $0x58] sm:$0xff]
      %v851 = vld [vmem:[%s8] sm:$0x1]
      %v853 = vlaneseq
      %v854 = vshrl.u32 %v853, 7
      %v855 = vsub.s32 0, %v854
      %v856 = vrot.slane %v851, %v855
      %v859 = vsel %vm604, %v835, 0
      %v862 = vsel %vm604, %v836, 0
      %v865 = vsel %vm604, %v837, 0
      %v868 = vsel %vm604, %v838, 0
      %870 = vmatprep.subr.mxu0 0.0
      %871 = vmatpush1.msra.mxu0 0.0
      %872 = vmatprep.subr.mxu0 0.0
      %873 = vmatpush1.msra.mxu0 0.0
      %874 = vmatprep.subr.mxu0 0.0
      %875 = vmatpush1.msra.mxu0 0.0
      %876 = vmatprep.subr.mxu0 0.0
      %877 = vmatpush1.msra.mxu0 0.0
      %878 = vmatprep.subr.mxu0 0.0
      %879 = vmatpush1.msra.mxu0 %v850
      %880 = vmatprep.subr.mxu0 0.0
      %881 = vmatpush1.msra.mxu0 %v849
      %882 = vmatprep.subr.mxu0 0.0
      %883 = vmatpush1.msra.mxu0 %v848
      %884 = vmatprep.subr.mxu0 0.0
      %885 = vmatpush1.msra.mxu0 %v847
      %886 = vmatprep.subr.mxu0 0.0
      %887 = vmatpush1.msra.mxu0 %v846
      %888 = vmatprep.subr.mxu0 0.0
      %889 = vmatpush1.msra.mxu0 %v845
      %890 = vmatprep.subr.mxu0 0.0
      %891 = vmatpush1.msra.mxu0 %v844
      %892 = vmatprep.subr.mxu0 0.0
      %893 = vmatpush1.msra.mxu0 %v843
      %894 = vmatprep.subr.mxu0 0.0
      %895 = vmatpush1.msra.mxu0 %v842
      %896 = vmatprep.subr.mxu0 0.0
      %897 = vmatpush1.msra.mxu0 %v841
      %898 = vmatprep.subr.mxu0 0.0
      %899 = vmatpush1.msra.mxu0 %v840
      %900 = vmatprep.subr.mxu0 0.0
      %901 = vmatpush1.msra.mxu0 %v839
      %902 = vmatprep.subr.mxu0 0.0
      %903 = vmatpush2.msra.mxu0 0.0
      %904 = vmatprep.subr.mxu0 0.0
      %905 = vmatpush2.msra.mxu0 0.0
      %906 = vmatprep.subr.mxu0 0.0
      %907 = vmatpush2.msra.mxu0 0.0
      %908 = vmatprep.subr.mxu0 0.0
      %909 = vmatpush2.msra.mxu0 0.0
      %910 = vmatprep.subr.mxu0 0.0
      %911 = vmatpush2.msra.mxu0 0.0
      %912 = vmatprep.subr.mxu0 0.0
      %913 = vmatpush2.msra.mxu0 0.0
      %914 = vmatprep.subr.mxu0 0.0
      %915 = vmatpush2.msra.mxu0 0.0
      %916 = vmatprep.subr.mxu0 0.0
      %917 = vmatpush2.msra.mxu0 0.0
      %918 = vmatprep.subr.mxu0 0.0
      %919 = vmatpush2.msra.mxu0 0.0
      %920 = vmatprep.subr.mxu0 0.0
      %921 = vmatpush2.msra.mxu0 0.0
      %922 = vmatprep.subr.mxu0 0.0
      %923 = vmatpush2.msra.mxu0 0.0
      %924 = vmatprep.subr.mxu0 0.0
      %925 = vmatpush2.msra.mxu0 0.0
      %926 = vmatprep.subr.mxu0 0.0
      %927 = vmatpush2.msra.mxu0 0.0
      %928 = vmatprep.subr.mxu0 0.0
      %929 = vmatpush2.msra.mxu0 0.0
      %930 = vmatprep.subr.mxu0 0.0
      %931 = vmatpush2.msra.mxu0 0.0
      %932 = vmatprep.subr.mxu0 0.0
      %933 = vmatpush2.msra.mxu0 0.0
      %934 = vmatprep.mubr.f32.mxu0 0.0
      %935 = vmatmul.mubr.f32.gmra.mxu0 %v859
      %v936 = vpop.f32.mrf.mxu0
      %v937 = vadd.f32 %v856, %v936
      %v938 = vpop.f32.mrf.mxu0
      %939 = vmatprep.mubr.f32.mxu0 0.0
      %940 = vmatmul.mubr.f32.gmra.mxu0 %v862
      %v941 = vpop.f32.mrf.mxu0
      %v942 = vadd.f32 %v856, %v941
      %v943 = vpop.f32.mrf.mxu0
      %944 = vmatprep.mubr.f32.mxu0 0.0
      %945 = vmatmul.mubr.f32.gmra.mxu0 %v865
      %v946 = vpop.f32.mrf.mxu0
      %v947 = vadd.f32 %v856, %v946
      %v948 = vpop.f32.mrf.mxu0
      %949 = vmatprep.mubr.f32.mxu0 0.0
      %950 = vmatmul.mubr.f32.gmra.mxu0 %v868
      %v951 = vpop.f32.mrf.mxu0
      %v952 = vadd.f32 %v856, %v951
      %v953 = vpop.f32.mrf.mxu0
      %954 = vdwg.mxu0
      %v955 = vmax.f32 %v937, 0.0
      %v956 = vmax.f32 %v942, 0.0
      %v957 = vmax.f32 %v947, 0.0
      %v958 = vmax.f32 %v952, 0.0
      %v959 = vsel %vm448, %v955, 0.0
      %960 = vadd.xlane.f32.xlu0 %v959
      %v961 = vpop.xlane.xlu0 %960
      %v962 = vsel %vm448, %v956, 0.0
      %963 = vadd.xlane.f32.xlu0 %v962
      %v964 = vpop.xlane.xlu0 %963
      %v965 = vsel %vm448, %v957, 0.0
      %966 = vadd.xlane.f32.xlu0 %v965
      %v967 = vpop.xlane.xlu0 %966
      %v968 = vsel %vm448, %v958, 0.0
      %969 = vadd.xlane.f32.xlu0 %v968
      %v970 = vpop.xlane.xlu0 %969
      %v971 = vmul.f32 %v961, %v461
      %v972 = vmul.f32 %v964, %v461
      %v973 = vmul.f32 %v967, %v461
      %v974 = vmul.f32 %v970, %v461
      %v975 = vmul.f32 %v955, %v955
      %v976 = vmul.f32 %v956, %v956
      %v977 = vmul.f32 %v957, %v957
      %v978 = vmul.f32 %v958, %v958
      %v979 = vsel %vm448, %v975, 0.0
      %980 = vadd.xlane.f32.xlu0 %v979
      %v981 = vpop.xlane.xlu0 %980
      %v982 = vsel %vm448, %v976, 0.0
      %983 = vadd.xlane.f32.xlu0 %v982
      %v984 = vpop.xlane.xlu0 %983
      %v985 = vsel %vm448, %v977, 0.0
      %986 = vadd.xlane.f32.xlu0 %v985
      %v987 = vpop.xlane.xlu0 %986
      %v988 = vsel %vm448, %v978, 0.0
      %989 = vadd.xlane.f32.xlu0 %v988
      %v990 = vpop.xlane.xlu0 %989
      %v991 = vmul.f32 %v981, %v461
      %v992 = vmul.f32 %v984, %v461
      %v993 = vmul.f32 %v987, %v461
      %v994 = vmul.f32 %v990, %v461
      %v995 = vmul.f32 %v971, %v971
      %v996 = vmul.f32 %v972, %v972
      %v997 = vmul.f32 %v973, %v973
      %v998 = vmul.f32 %v974, %v974
      %v999 = vsub.f32 %v991, %v995
      %v1000 = vsub.f32 %v992, %v996
      %v1001 = vsub.f32 %v993, %v997
      %v1002 = vsub.f32 %v994, %v998
      %v1003 = vadd.f32 %v999, 1e-05
      %v1004 = vadd.f32 %v1000, 1e-05
      %v1005 = vadd.f32 %v1001, 1e-05
      %v1006 = vadd.f32 %v1002, 1e-05
      %v1007 = vrsqrt.pop %v1003
      %v1008 = vrsqrt.pop %v1004
      %v1009 = vrsqrt.pop %v1005
      %v1010 = vrsqrt.pop %v1006
      %v1011 = vsub.f32 %v955, %v971
      %v1012 = vsub.f32 %v956, %v972
      %v1013 = vsub.f32 %v957, %v973
      %v1014 = vsub.f32 %v958, %v974
      %v1015 = vmul.f32 %v1011, %v1007
      %v1016 = vmul.f32 %v1012, %v1008
      %v1017 = vmul.f32 %v1013, %v1009
      %v1018 = vmul.f32 %v1014, %v1010
      %v1019 = vld [vmem:[%s9] sm:$0x1]
      %v1021 = vlaneseq
      %v1022 = vshrl.u32 %v1021, 7
      %v1023 = vsub.s32 0, %v1022
      %v1024 = vrot.slane %v1019, %v1023
      %v1026 = vmul.f32 %v1015, %v1024
      %v1027 = vmul.f32 %v1016, %v1024
      %v1028 = vmul.f32 %v1017, %v1024
      %v1029 = vmul.f32 %v1018, %v1024
      %v1030 = vld [vmem:[%s10] sm:$0x1]
      %v1032 = vlaneseq
      %v1033 = vshrl.u32 %v1032, 7
      %v1034 = vsub.s32 0, %v1033
      %v1035 = vrot.slane %v1030, %v1034
      %v1037 = vadd.f32 %v1026, %v1035
      %v1038 = vadd.f32 %v1027, %v1035
      %v1039 = vadd.f32 %v1028, %v1035
      %v1040 = vadd.f32 %v1029, %v1035
      %v1045 = vrot.slane %v1037, 4
      %v1046 = vrot.slane %v1038, 4
      %v1047 = vsel %vm536, %v1045, %v1046
      %v1048 = vrot.slane %v1039, 4
      %v1049 = vsel %vm536, %v1046, %v1048
      %v1050 = vrot.slane %v1040, 4
      %v1051 = vsel %vm536, %v1048, %v1050
      %v1056 = vsel %vm536, 0.0, %v1045
      %v1058 = vsel %vm536, %v1050, 0.0
      %1059 = vrot.lane.b32.xlu0 %v1037, 32
      %v1060 = vpop.permute.xlu0 %1059
      %1061 = vrot.lane.b32.xlu0 %v1038, 32
      %v1062 = vpop.permute.xlu0 %1061
      %1063 = vrot.lane.b32.xlu0 %v1039, 32
      %v1064 = vpop.permute.xlu0 %1063
      %1065 = vrot.lane.b32.xlu0 %v1040, 32
      %v1066 = vpop.permute.xlu0 %1065
      %1072 = vrot.lane.b32.xlu0 %v1047, 64
      %v1073 = vpop.permute.xlu0 %1072
      %1074 = vrot.lane.b32.xlu0 %v1049, 64
      %v1075 = vpop.permute.xlu0 %1074
      %1076 = vrot.lane.b32.xlu0 %v1051, 64
      %v1077 = vpop.permute.xlu0 %1076
      %1078 = vrot.lane.b32.xlu0 %v1058, 64
      %v1079 = vpop.permute.xlu0 %1078
      %v1084 = vsel %vm448, %v1056, %v1060
      %v1085 = vsel %vm448, %v1047, %v1062
      %v1086 = vsel %vm448, %v1049, %v1064
      %v1087 = vsel %vm448, %v1051, %v1066
      %v1088 = vsel %vm580, %v1084, %v1073
      %v1089 = vsel %vm580, %v1085, %v1075
      %v1090 = vsel %vm580, %v1086, %v1077
      %v1091 = vsel %vm580, %v1087, %v1079
      %v1092 = vld [vmem:[%s11] sm:$0xff]
      %v1093 = vld [vmem:[%s11 + $0x8] sm:$0xff]
      %v1094 = vld [vmem:[%s11 + $0x10] sm:$0xff]
      %v1095 = vld [vmem:[%s11 + $0x18] sm:$0xff]
      %v1096 = vld [vmem:[%s11 + $0x20] sm:$0xff]
      %v1097 = vld [vmem:[%s11 + $0x28] sm:$0xff]
      %v1098 = vld [vmem:[%s11 + $0x30] sm:$0xff]
      %v1099 = vld [vmem:[%s11 + $0x38] sm:$0xff]
      %v1100 = vld [vmem:[%s11 + $0x40] sm:$0xff]
      %v1101 = vld [vmem:[%s11 + $0x48] sm:$0xff]
      %v1102 = vld [vmem:[%s11 + $0x50] sm:$0xff]
      %v1103 = vld [vmem:[%s11 + $0x58] sm:$0xff]
      %v1104 = vld [vmem:[%s12] sm:$0x1]
      %v1106 = vlaneseq
      %v1107 = vshrl.u32 %v1106, 7
      %v1108 = vsub.s32 0, %v1107
      %v1109 = vrot.slane %v1104, %v1108
      %v1112 = vsel %vm604, %v1088, 0
      %v1115 = vsel %vm604, %v1089, 0
      %v1118 = vsel %vm604, %v1090, 0
      %v1121 = vsel %vm604, %v1091, 0
      %1123 = vmatprep.subr.mxu0 0.0
      %1124 = vmatpush1.msra.mxu0 0.0
      %1125 = vmatprep.subr.mxu0 0.0
      %1126 = vmatpush1.msra.mxu0 0.0
      %1127 = vmatprep.subr.mxu0 0.0
      %1128 = vmatpush1.msra.mxu0 0.0
      %1129 = vmatprep.subr.mxu0 0.0
      %1130 = vmatpush1.msra.mxu0 0.0
      %1131 = vmatprep.subr.mxu0 0.0
      %1132 = vmatpush1.msra.mxu0 %v1103
      %1133 = vmatprep.subr.mxu0 0.0
      %1134 = vmatpush1.msra.mxu0 %v1102
      %1135 = vmatprep.subr.mxu0 0.0
      %1136 = vmatpush1.msra.mxu0 %v1101
      %1137 = vmatprep.subr.mxu0 0.0
      %1138 = vmatpush1.msra.mxu0 %v1100
      %1139 = vmatprep.subr.mxu0 0.0
      %1140 = vmatpush1.msra.mxu0 %v1099
      %1141 = vmatprep.subr.mxu0 0.0
      %1142 = vmatpush1.msra.mxu0 %v1098
      %1143 = vmatprep.subr.mxu0 0.0
      %1144 = vmatpush1.msra.mxu0 %v1097
      %1145 = vmatprep.subr.mxu0 0.0
      %1146 = vmatpush1.msra.mxu0 %v1096
      %1147 = vmatprep.subr.mxu0 0.0
      %1148 = vmatpush1.msra.mxu0 %v1095
      %1149 = vmatprep.subr.mxu0 0.0
      %1150 = vmatpush1.msra.mxu0 %v1094
      %1151 = vmatprep.subr.mxu0 0.0
      %1152 = vmatpush1.msra.mxu0 %v1093
      %1153 = vmatprep.subr.mxu0 0.0
      %1154 = vmatpush1.msra.mxu0 %v1092
      %1155 = vmatprep.subr.mxu0 0.0
      %1156 = vmatpush2.msra.mxu0 0.0
      %1157 = vmatprep.subr.mxu0 0.0
      %1158 = vmatpush2.msra.mxu0 0.0
      %1159 = vmatprep.subr.mxu0 0.0
      %1160 = vmatpush2.msra.mxu0 0.0
      %1161 = vmatprep.subr.mxu0 0.0
      %1162 = vmatpush2.msra.mxu0 0.0
      %1163 = vmatprep.subr.mxu0 0.0
      %1164 = vmatpush2.msra.mxu0 0.0
      %1165 = vmatprep.subr.mxu0 0.0
      %1166 = vmatpush2.msra.mxu0 0.0
      %1167 = vmatprep.subr.mxu0 0.0
      %1168 = vmatpush2.msra.mxu0 0.0
      %1169 = vmatprep.subr.mxu0 0.0
      %1170 = vmatpush2.msra.mxu0 0.0
      %1171 = vmatprep.subr.mxu0 0.0
      %1172 = vmatpush2.msra.mxu0 0.0
      %1173 = vmatprep.subr.mxu0 0.0
      %1174 = vmatpush2.msra.mxu0 0.0
      %1175 = vmatprep.subr.mxu0 0.0
      %1176 = vmatpush2.msra.mxu0 0.0
      %1177 = vmatprep.subr.mxu0 0.0
      %1178 = vmatpush2.msra.mxu0 0.0
      %1179 = vmatprep.subr.mxu0 0.0
      %1180 = vmatpush2.msra.mxu0 0.0
      %1181 = vmatprep.subr.mxu0 0.0
      %1182 = vmatpush2.msra.mxu0 0.0
      %1183 = vmatprep.subr.mxu0 0.0
      %1184 = vmatpush2.msra.mxu0 0.0
      %1185 = vmatprep.subr.mxu0 0.0
      %1186 = vmatpush2.msra.mxu0 0.0
      %1187 = vmatprep.mubr.f32.mxu0 0.0
      %1188 = vmatmul.mubr.f32.gmra.mxu0 %v1112
      %v1189 = vpop.f32.mrf.mxu0
      %v1190 = vadd.f32 %v1109, %v1189
      %v1191 = vpop.f32.mrf.mxu0
      %1192 = vmatprep.mubr.f32.mxu0 0.0
      %1193 = vmatmul.mubr.f32.gmra.mxu0 %v1115
      %v1194 = vpop.f32.mrf.mxu0
      %v1195 = vadd.f32 %v1109, %v1194
      %v1196 = vpop.f32.mrf.mxu0
      %1197 = vmatprep.mubr.f32.mxu0 0.0
      %1198 = vmatmul.mubr.f32.gmra.mxu0 %v1118
      %v1199 = vpop.f32.mrf.mxu0
      %v1200 = vadd.f32 %v1109, %v1199
      %v1201 = vpop.f32.mrf.mxu0
      %1202 = vmatprep.mubr.f32.mxu0 0.0
      %1203 = vmatmul.mubr.f32.gmra.mxu0 %v1121
      %v1204 = vpop.f32.mrf.mxu0
      %v1205 = vadd.f32 %v1109, %v1204
      %v1206 = vpop.f32.mrf.mxu0
      %1207 = vdwg.mxu0
      %1208 = vst.msk [vmem:[%s442] sm:$0xff] %vm448, %v1190
      %1209 = vst.msk [vmem:[%s442 + $0x8] sm:$0xff] %vm448, %v1195
      %1210 = vst.msk [vmem:[%s442 + $0x10] sm:$0xff] %vm448, %v1200
      %1211 = vst.msk [vmem:[%s442 + $0x18] sm:$0xff] %vm448, %v1205
      %s1212 = smul.u32 4, %s24
      %p1213 = scmp.lt.s32.totalorder %s1212, 7
      %s1214 = scalar_select %p1213, %s1212, 7
      %s1215 = smul.addr %s1214, 8
      %s1216 = scalar_lea.vmem %s13, %s1215
      // Predicated region
      $region73: #{tpu_custom_call.1} parent=71 // pred_check
        %p1217 = pneg %p320
      $region74: #{tpu_custom_call.1} parent=71 // pred_check_branch
        %1219 = sbr.rel (%p1217) target = $region76
      $region75: #{tpu_custom_call.1} parent=71 // pred_region
        %s1220 = smul.u32 4, %s24
      $region76: #{tpu_custom_call.1} parent=71 // pred_fallthru
        _
    $region72: #{tpu_custom_call.1} parent=5 // pred_fallthru
      _
    %p1221 = scmp.le.s32.totalorder 2, %s19
    // Predicated region
    $region77: #{tpu_custom_call.1} parent=5 // pred_check
      %p1222 = pneg %p1221
    $region78: #{tpu_custom_call.1} parent=5 // pred_check_branch
      %1224 = sbr.rel (%p1222) target = $region80
    $region79: #{tpu_custom_call.1} parent=5 // pred_region
      %s1225 = ssub.s32 %s19, 2
      // Predicated region
      $region81: #{tpu_custom_call.1} parent=79 // pred_check
        %p1226 = pneg %p326
      $region82: #{tpu_custom_call.1} parent=79 // pred_check_branch
        %1228 = sbr.rel (%p1226) target = $region84
      $region83: #{tpu_custom_call.1} parent=79 // pred_region
        %s1229 = smul.u32 4, %s25
        %p1230 = scmp.lt.s32.totalorder %s1229, 7
        %s1231 = scalar_select %p1230, %s1229, 7
        %s1232 = smul.addr %s1231, 8
        %s1233 = scalar_lea.vmem %s13, %s1232
      $region84: #{tpu_custom_call.1} parent=79 // pred_fallthru
        _
    $region80: #{tpu_custom_call.1} parent=5 // pred_fallthru
      _
  $region6: #{tpu_custom_call.1} parent=0 // loop_footer
    %s23 = sadd.s32 1, %s19
  $region7: #{tpu_custom_call.1} parent=0 // loop_footer_branch
    %18 = sbr.rel target = $region3
  $region8: #{tpu_custom_call.1} parent=0 // loop_exit
    _

</llo_original>
